<compile_context>
chip_gen: v6e
topology: v6e:2x2x1
jax: 0.10.0
libtpu: 0.0.40
codegen_flags: <defaults>
</compile_context>

<pallas_src>
import functools
import math

import jax
import jax.numpy as jnp
from jax.experimental import pallas as pl
from jax.experimental.pallas import tpu as pltpu


# ----------------------------------------------------------------------------
# small synthetic "cfg" (same structure parse_cfg() would yield)
# ----------------------------------------------------------------------------
CFG_BLOCKS = [
    {'type': 'net', 'batch': '2', 'width': '16', 'height': '16', 'channels': '3'},
    {'type': 'convolutional', 'batch_normalize': '1', 'filters': '8',  'size': '3', 'stride': '1', 'pad': '1', 'activation': 'leaky'},   # 0
    {'type': 'convolutional', 'batch_normalize': '1', 'filters': '16', 'size': '3', 'stride': '2', 'pad': '1', 'activation': 'leaky'},   # 1
    {'type': 'convolutional', 'batch_normalize': '1', 'filters': '8',  'size': '1', 'stride': '1', 'pad': '1', 'activation': 'leaky'},   # 2
    {'type': 'convolutional', 'batch_normalize': '1', 'filters': '16', 'size': '3', 'stride': '1', 'pad': '1', 'activation': 'leaky'},   # 3
    {'type': 'shortcut', 'from': '-3', 'activation': 'linear'},                                                                           # 4
    {'type': 'convolutional', 'batch_normalize': '1', 'filters': '32', 'size': '3', 'stride': '2', 'pad': '1', 'activation': 'leaky'},   # 5
    {'type': 'convolutional', 'filters': '27', 'size': '1', 'stride': '1', 'pad': '1', 'activation': 'linear'},                          # 6
    {'type': 'yolo', 'mask': '0,1,2', 'anchors': '10,13,16,30,33,23,30,61,62,45,59,119',
     'classes': '4', 'num': '6', 'ignore_thresh': '0.7'},                                                                                 # 7
    {'type': 'route', 'layers': '-4'},                                                                                                    # 8
    {'type': 'convolutional', 'batch_normalize': '1', 'filters': '8',  'size': '1', 'stride': '1', 'pad': '1', 'activation': 'leaky'},   # 9
    {'type': 'upsample', 'stride': '2'},                                                                                                  # 10
    {'type': 'route', 'layers': '-1,-11'},                                                                                                # 11
    {'type': 'convolutional', 'filters': '27', 'size': '1', 'stride': '1', 'pad': '1', 'activation': 'linear'},                          # 12
    {'type': 'yolo', 'mask': '3,4,5', 'anchors': '10,13,16,30,33,23,30,61,62,45,59,119',
     'classes': '4', 'num': '6', 'ignore_thresh': '0.7'},                                                                                 # 13
]


def _round_up(x, m):
    return ((x + m - 1) // m) * m


# ----------------------------------------------------------------------------
# Pallas kernels
# ----------------------------------------------------------------------------
def _conv_mm_kernel(x_ref, w_ref, b_ref, o_ref, acc_ref, *, leaky):
    # fused: bf16 im2col-matmul (MXU, f32 acc) + folded-BN bias + LeakyReLU(0.1)
    @pl.when(pl.program_id(1) == 0)
    def _init():
        acc_ref[...] = jnp.zeros_like(acc_ref)

    acc_ref[...] += jnp.dot(x_ref[...], w_ref[...],
                            preferred_element_type=jnp.float32)

    @pl.when(pl.program_id(1) == pl.num_programs(1) - 1)
    def _fin():
        y = acc_ref[...] + b_ref[...]
        if leaky:
            y = jnp.where(y > 0, y, 0.1 * y)
        o_ref[...] = y


def _conv_mm_res_kernel(x_ref, w_ref, b_ref, r_ref, o_ref, acc_ref, *, leaky):
    # same as above but with the residual (shortcut) add fused into the epilogue
    @pl.when(pl.program_id(1) == 0)
    def _init():
        acc_ref[...] = jnp.zeros_like(acc_ref)

    acc_ref[...] += jnp.dot(x_ref[...], w_ref[...],
                            preferred_element_type=jnp.float32)

    @pl.when(pl.program_id(1) == pl.num_programs(1) - 1)
    def _fin():
        y = acc_ref[...] + b_ref[...]
        if leaky:
            y = jnp.where(y > 0, y, 0.1 * y)
        o_ref[...] = y + r_ref[...]


def fused_conv_matmul(x2d, w2d, bias, leaky, res2d=None):
    """x2d: (M, K) patches, w2d: (K, Cout) scale-folded weights.
    Returns (M, Cout) float32 = act(x2d @ w2d + bias) [+ res2d]."""
    M, K = x2d.shape
    Cout = w2d.shape[1]
    tm = min(512, _round_up(M, 128))
    tk = min(512, _round_up(K, 128))
    Mp = _round_up(M, tm)
    Kp = _round_up(K, tk)
    Np = _round_up(Cout, 128)

    # bf16 operands for the MXU; f32 accumulation + f32 epilogue.
    xp = jnp.pad(x2d, ((0, Mp - M), (0, Kp - K))).astype(jnp.bfloat16)
    wp = jnp.pad(w2d, ((0, Kp - K), (0, Np - Cout))).astype(jnp.bfloat16)
    bp = jnp.pad(bias.astype(jnp.float32), (0, Np - Cout)).reshape(1, Np)

    in_specs = [
        pl.BlockSpec((tm, tk), lambda i, k: (i, k)),
        pl.BlockSpec((tk, Np), lambda i, k: (k, 0)),
        pl.BlockSpec((1, Np), lambda i, k: (0, 0)),
    ]
    operands = [xp, wp, bp]
    if res2d is not None:
        rp = jnp.pad(res2d.astype(jnp.float32), ((0, Mp - M), (0, Np - Cout)))
        in_specs.append(pl.BlockSpec((tm, Np), lambda i, k: (i, 0)))
        operands.append(rp)
        kernel = functools.partial(_conv_mm_res_kernel, leaky=leaky)
    else:
        kernel = functools.partial(_conv_mm_kernel, leaky=leaky)

    out = pl.pallas_call(
        kernel,
        out_shape=jax.ShapeDtypeStruct((Mp, Np), jnp.float32),
        grid_spec=pltpu.PrefetchScalarGridSpec(
            num_scalar_prefetch=0,
            grid=(Mp // tm, Kp // tk),
            in_specs=in_specs,
            out_specs=pl.BlockSpec((tm, Np), lambda i, k: (i, 0)),
            scratch_shapes=[pltpu.VMEM((tm, Np), jnp.float32)],
        ),
        compiler_params=pltpu.CompilerParams(
            dimension_semantics=("parallel", "arbitrary"),
            vmem_limit_bytes=48 * 1024 * 1024,
        ),
    )(*operands)
    if Mp == M and Np == Cout:
        return out
    return out[:M, :Cout]


def _add_kernel(a_ref, b_ref, o_ref):
    o_ref[...] = a_ref[...] + b_ref[...]


def pallas_add(a, b):
    """Elementwise residual add fallback (only used when the shortcut cannot be
    fused into the producing conv's epilogue). Lane-dense, gridded."""
    shape = a.shape
    flat = int(math.prod(shape))
    lanes = 128
    rows = -(-flat // lanes)
    tr = min(1024, _round_up(rows, 8))
    rows_p = _round_up(rows, tr)
    total = rows_p * lanes
    ap = jnp.pad(a.reshape(-1), (0, total - flat)).reshape(rows_p, lanes)
    bp = jnp.pad(b.reshape(-1), (0, total - flat)).reshape(rows_p, lanes)
    out = pl.pallas_call(
        _add_kernel,
        out_shape=jax.ShapeDtypeStruct((rows_p, lanes), a.dtype),
        grid_spec=pltpu.PrefetchScalarGridSpec(
            num_scalar_prefetch=0,
            grid=(rows_p // tr,),
            in_specs=[pl.BlockSpec((tr, lanes), lambda i: (i, 0)),
                      pl.BlockSpec((tr, lanes), lambda i: (i, 0))],
            out_specs=pl.BlockSpec((tr, lanes), lambda i: (i, 0)),
        ),
        compiler_params=pltpu.CompilerParams(dimension_semantics=("parallel",)),
    )(ap, bp)
    return out.reshape(-1)[:flat].reshape(shape)


# ----------------------------------------------------------------------------
# glue: im2col conv wrapper (NHWC), upsample, yolo predict_transform
# ----------------------------------------------------------------------------
def conv_block(x_nhwc, params, leaky, residual=None):
    """x_nhwc: (N, H, W, Cin). Conv2d(+folded BN)+activation(+fused residual)."""
    k, stride, pad = params['ksize'], params['stride'], params['pad']
    Cin, Cout = params['cin'], params['cout']
    if pad:
        x_nhwc = jnp.pad(x_nhwc, ((0, 0), (pad, pad), (pad, pad), (0, 0)))
    N, Hp, Wp, _ = x_nhwc.shape
    Ho = (Hp - k) // stride + 1
    Wo = (Wp - k) // stride + 1
    if k == 1 and stride == 1:
        patches = x_nhwc.reshape(N * Ho * Wo, Cin)
    else:
        # TODO(synk): im2col is built host-side; an in-kernel strided-window DMA
        # would avoid materializing the k*k-inflated patch matrix in HBM.
        cols = []
        for di in range(k):
            for dj in range(k):
                cols.append(x_nhwc[:, di:di + stride * Ho:stride,
                                   dj:dj + stride * Wo:stride, :])
        patches = jnp.concatenate(cols, axis=-1).reshape(N * Ho * Wo, k * k * Cin)
    res2d = None if residual is None else residual.reshape(N * Ho * Wo, Cout)
    out2d = fused_conv_matmul(patches, params['w2d'], params['bias'], leaky, res2d)
    return out2d.reshape(N, Ho, Wo, Cout)


def upsample_nearest_nhwc(x, s):
    return jnp.repeat(jnp.repeat(x, s, axis=1), s, axis=2)


def predict_transform_nhwc(pred, inp_dim, anchors, num_classes):
    # canonical YOLOv3 detection-head transform, NHWC-native (same element
    # ordering as the NCHW reference transform).
    N, H, W, C = pred.shape
    stride = inp_dim // H
    grid_size = H
    bbox_attrs = 5 + num_classes
    na = len(anchors)
    p = pred.reshape(N, grid_size * grid_size * na, bbox_attrs)

    anc = jnp.array([[a[0] / stride, a[1] / stride] for a in anchors], jnp.float32)
    g = jnp.arange(grid_size, dtype=jnp.float32)
    a_off, b_off = jnp.meshgrid(g, g)
    xy_off = jnp.concatenate([a_off.reshape(-1, 1), b_off.reshape(-1, 1)], axis=1)
    xy_off = jnp.repeat(xy_off, na, axis=0)[None]                      # (1, G*G*na, 2)
    anc_t = jnp.tile(anc, (grid_size * grid_size, 1))[None]            # (1, G*G*na, 2)

    xy = jax.nn.sigmoid(p[..., 0:2]) + xy_off
    wh = jnp.exp(p[..., 2:4]) * anc_t
    conf = jax.nn.sigmoid(p[..., 4:5])
    cls = jax.nn.sigmoid(p[..., 5:])
    box = jnp.concatenate([xy, wh], axis=-1) * stride
    return jnp.concatenate([box, conf, cls], axis=-1)


# ----------------------------------------------------------------------------
# deterministic parameter init (mirrors create_modules shapes) + forward
# ----------------------------------------------------------------------------
def init_params(blocks, key):
    net_info = blocks[0]
    prev_filters = int(net_info.get('channels', 3))
    output_filters = []
    params_list = []
    for index, blk in enumerate(blocks[1:]):
        params = {}
        filters = prev_filters
        if blk['type'] == 'convolutional':
            bn = int(blk.get('batch_normalize', 0))
            filters = int(blk['filters'])
            ksize = int(blk['size'])
            stride = int(blk['stride'])
            pad = (ksize - 1) // 2 if int(blk['pad']) else 0
            key, k1, k2, k3, k4, k5 = jax.random.split(key, 6)
            w = jax.random.normal(k1, (filters, prev_filters, ksize, ksize), jnp.float32) * 0.05
            if bn:
                # TODO(synk): BN folded with running statistics (eval-mode); train-mode batch stats not implemented.
                gamma = 1.0 + 0.1 * jax.random.normal(k2, (filters,), jnp.float32)
                beta = 0.1 * jax.random.normal(k3, (filters,), jnp.float32)
                mean = 0.1 * jax.random.normal(k4, (filters,), jnp.float32)
                var = jnp.abs(1.0 + 0.1 * jax.random.normal(k5, (filters,), jnp.float32))
                scale = gamma / jnp.sqrt(var + 1e-5)
                bias = beta - mean * scale
            else:
                scale = jnp.ones((filters,), jnp.float32)
                bias = 0.1 * jax.random.normal(k2, (filters,), jnp.float32)
            # fold BN scale into the weights host-side; store im2col (di,dj,cin) order
            w_scaled = w * scale[:, None, None, None]
            w2d = jnp.transpose(w_scaled, (2, 3, 1, 0)).reshape(ksize * ksize * prev_filters, filters)
            params = dict(w2d=w2d, bias=bias, stride=stride, pad=pad,
                          ksize=ksize, cin=prev_filters, cout=filters)
        elif blk['type'] == 'route':
            layers = [int(a) for a in blk['layers'].split(',')]
            start = layers[0]
            end = layers[1] if len(layers) > 1 else 0
            if start > 0:
                start -= index
            if end > 0:
                end -= index
            if end < 0:
                filters = output_filters[index + start] + output_filters[index + end]
            else:
                filters = output_filters[index + start]
        elif blk['type'] == 'yolo':
            mask = [int(m) for m in blk['mask'].split(',')]
            anchors = [int(a) for a in blk['anchors'].split(',')]
            anchors = [(anchors[i], anchors[i + 1]) for i in range(0, len(anchors), 2)]
            anchors = [anchors[m] for m in mask]
            params = dict(anchors=anchors)
        params_list.append(params)
        prev_filters = filters
        output_filters.append(filters)
    return params_list


def _shortcut_fusion_target(blocks, conv_idx):
    """If blocks layer conv_idx+1 is a shortcut adding this conv's output and
    nothing else references the pre-add conv output, return its 'from' offset
    (so the add can be fused into the conv epilogue); otherwise None."""
    layers = blocks[1:]
    if conv_idx + 1 >= len(layers) or layers[conv_idx + 1]['type'] != 'shortcut':
        return None
    frm = int(layers[conv_idx + 1]['from'])
    if conv_idx + 1 + frm == conv_idx:   # residual would be the conv output itself
        return None
    for j, blk in enumerate(layers):
        refs = []
        if blk['type'] == 'route':
            ls = [int(a) for a in str(blk['layers']).split(',')]
            refs = [l if l > 0 else j + l for l in ls]
        elif blk['type'] == 'shortcut' and j != conv_idx + 1:
            refs = [j - 1, j + int(blk['from'])]
        if conv_idx in refs:
            return None
    return frm


def darknet53_forward(x_nchw, blocks, params_list):
    net_info = blocks[0]
    x = jnp.transpose(x_nchw, (0, 2, 3, 1))   # NCHW -> NHWC once at the boundary
    outputs = {}
    detections = None
    fused_shortcuts = set()
    layers = blocks[1:]
    for i, module in enumerate(layers):
        mtype = module['type']
        if mtype == 'convolutional':
            p = params_list[i]
            leaky = module['activation'] == 'leaky'
            residual = None
            frm = _shortcut_fusion_target(blocks, i)
            if frm is not None:
                cand = outputs.get(i + 1 + frm)
                if cand is not None:
                    N_, Hin, Win, _ = x.shape
                    Ho = (Hin + 2 * p['pad'] - p['ksize']) // p['stride'] + 1
                    Wo = (Win + 2 * p['pad'] - p['ksize']) // p['stride'] + 1
                    if cand.shape == (N_, Ho, Wo, p['cout']):
                        residual = cand
                        fused_shortcuts.add(i + 1)
            x = conv_block(x, p, leaky, residual)
        elif mtype == 'upsample':
            x = upsample_nearest_nhwc(x, int(module['stride']))
        elif mtype == 'route':
            ls = [int(a) for a in str(module['layers']).split(',')]
            if ls[0] > 0:
                ls[0] -= i
            if len(ls) == 1:
                x = outputs[i + ls[0]]
            else:
                if ls[1] > 0:
                    ls[1] -= i
                x = jnp.concatenate([outputs[i + ls[0]], outputs[i + ls[1]]], axis=-1)
        elif mtype == 'shortcut':
            if i in fused_shortcuts:
                x = outputs[i - 1]       # add was fused into the previous conv
            else:
                frm = int(module['from'])
                x = pallas_add(outputs[i - 1], outputs[i + frm])
        elif mtype == 'yolo':
            anchors = params_list[i]['anchors']
            inp_dim = int(net_info['height'])
            num_classes = int(module['classes'])
            x = predict_transform_nhwc(x, inp_dim, anchors, num_classes)
            detections = x if detections is None else jnp.concatenate([detections, x], axis=1)
        outputs[i] = x
    return detections


if __name__ == "__main__":
    key = jax.random.PRNGKey(0)
    key, xk, pk = jax.random.split(key, 3)
    x = jax.random.normal(xk, (2, 3, 16, 16), jnp.float32)   # NCHW like PyTorch

    params_list = init_params(CFG_BLOCKS, pk)
    det = darknet53_forward(x, CFG_BLOCKS, params_list)
    det = jax.block_until_ready(det)

    # yolo head @4x4 -> 48 boxes, yolo head @16x16 -> 768 boxes, 5+4 attrs
    assert det.shape == (2, 4 * 4 * 3 + 16 * 16 * 3, 9), det.shape
    assert bool(jnp.all(jnp.isfinite(det)))
    print("KERNEL_OK")
</pallas_src>

<mosaic_0001>
module attributes {stable_mosaic.version = 11 : i64} {
  func.func @_conv_mm_kernel(%arg0: i32, %arg1: i32, %arg2: memref<512x128xbf16, #tpu.memory_space<vmem>>, %arg3: memref<128x128xbf16, #tpu.memory_space<vmem>>, %arg4: memref<1x128xf32, #tpu.memory_space<vmem>>, %arg5: memref<512x128xf32, #tpu.memory_space<vmem>>, %arg6: memref<512x128xf32, #tpu.memory_space<vmem>>) attributes {dimension_semantics = [#tpu.dimension_semantics<parallel>, #tpu.dimension_semantics<arbitrary>], iteration_bounds = array<i64: 1, 1>, scalar_prefetch = 0 : i64, scratch_operands = 1 : i64, tpu.core_type = #tpu.core_type<tc>, window_params = [{transform_indices = @transform_0, window_bounds = array<i64: 512, 128>}, {transform_indices = @transform_1, window_bounds = array<i64: 128, 128>}, {pipeline_mode = #tpu.pipeline_mode<synchronous>, transform_indices = @transform_2, window_bounds = array<i64: 1, 128>}, {transform_indices = @transform_3, window_bounds = array<i64: 512, 128>}]} {
    %c0_i32 = arith.constant 0 : i32
    %0 = arith.cmpi eq, %arg1, %c0_i32 : i32
    %1 = arith.extui %0 : i1 to i32
    %c0_i32_0 = arith.constant 0 : i32
    %2 = arith.cmpi ne, %1, %c0_i32_0 : i32
    scf.if %2 {
      %cst_10 = arith.constant 0.000000e+00 : f32
      %12 = vector.broadcast %cst_10 : f32 to vector<512x128xf32>
      %c0_11 = arith.constant 0 : index
      %c0_12 = arith.constant 0 : index
      %13 = vector.load %arg6[%c0_11, %c0_12] : memref<512x128xf32, #tpu.memory_space<vmem>>, vector<512x128xf32>
      tpu.vector_store %arg6[%c0_11, %c0_12], %12 {strides = array<i32>} : memref<512x128xf32, #tpu.memory_space<vmem>>, vector<512x128xf32>,
    } else {
    }
    %c0 = arith.constant 0 : index
    %c0_1 = arith.constant 0 : index
    %3 = vector.load %arg6[%c0, %c0_1] : memref<512x128xf32, #tpu.memory_space<vmem>>, vector<512x128xf32>
    %c0_2 = arith.constant 0 : index
    %c0_3 = arith.constant 0 : index
    %4 = vector.load %arg2[%c0_2, %c0_3] : memref<512x128xbf16, #tpu.memory_space<vmem>>, vector<512x128xbf16>
    %c0_4 = arith.constant 0 : index
    %c0_5 = arith.constant 0 : index
    %5 = vector.load %arg3[%c0_4, %c0_5] : memref<128x128xbf16, #tpu.memory_space<vmem>>, vector<128x128xbf16>
    %cst = arith.constant dense<0.000000e+00> : vector<512x128xf32>
    %6 = tpu.matmul %4, %5, %cst {dimension_numbers = #tpu.dot_dimension_numbers<[1], [0], [0], [1], [0, 0, 1, 1], [], []>} : vector<512x128xbf16>, vector<128x128xbf16>, vector<512x128xf32> -> vector<512x128xf32>
    %7 = arith.addf %3, %6 : vector<512x128xf32>
    %c0_6 = arith.constant 0 : index
    %c0_7 = arith.constant 0 : index
    %8 = vector.load %arg6[%c0_6, %c0_7] : memref<512x128xf32, #tpu.memory_space<vmem>>, vector<512x128xf32>
    tpu.vector_store %arg6[%c0_6, %c0_7], %7 {strides = array<i32>} : memref<512x128xf32, #tpu.memory_space<vmem>>, vector<512x128xf32>,
    %c0_i32_8 = arith.constant 0 : i32
    %9 = arith.cmpi eq, %arg1, %c0_i32_8 : i32
    %10 = arith.extui %9 : i1 to i32
    %c0_i32_9 = arith.constant 0 : i32
    %11 = arith.cmpi ne, %10, %c0_i32_9 : i32
    scf.if %11 {
      %c0_10 = arith.constant 0 : index
      %c0_11 = arith.constant 0 : index
      %12 = vector.load %arg6[%c0_10, %c0_11] : memref<512x128xf32, #tpu.memory_space<vmem>>, vector<512x128xf32>
      %c0_12 = arith.constant 0 : index
      %c0_13 = arith.constant 0 : index
      %13 = vector.load %arg4[%c0_12, %c0_13] : memref<1x128xf32, #tpu.memory_space<vmem>>, vector<1x128xf32>
      %14 = vector.broadcast %13 : vector<1x128xf32> to vector<512x128xf32>
      %15 = arith.addf %12, %14 : vector<512x128xf32>
      %cst_14 = arith.constant 0.000000e+00 : f32
      %16 = vector.broadcast %cst_14 : f32 to vector<512x128xf32>
      %17 = arith.cmpf ogt, %15, %16 : vector<512x128xf32>
      %cst_15 = arith.constant 1.000000e-01 : f32
      %18 = vector.broadcast %cst_15 : f32 to vector<512x128xf32>
      %19 = arith.mulf %18, %15 : vector<512x128xf32>
      %20 = arith.select %17, %15, %19 : vector<512x128xi1>, vector<512x128xf32>
      %c0_16 = arith.constant 0 : index
      %c0_17 = arith.constant 0 : index
      %21 = vector.load %arg5[%c0_16, %c0_17] : memref<512x128xf32, #tpu.memory_space<vmem>>, vector<512x128xf32>
      tpu.vector_store %arg5[%c0_16, %c0_17], %20 {strides = array<i32>} : memref<512x128xf32, #tpu.memory_space<vmem>>, vector<512x128xf32>,
    } else {
    }
    return
  }
  func.func @transform_0(%arg0: i32, %arg1: i32) -> (i32, i32) {
    %c0_i32 = arith.constant 0 : i32
    return %arg0, %arg1 : i32, i32
  }
  func.func @transform_1(%arg0: i32, %arg1: i32) -> (i32, i32) {
    %c0_i32 = arith.constant 0 : i32
    %c0_i32_0 = arith.constant 0 : i32
    return %arg1, %c0_i32 : i32, i32
  }
  func.func @transform_2(%arg0: i32, %arg1: i32) -> (i32, i32) {
    %c0_i32 = arith.constant 0 : i32
    %c0_i32_0 = arith.constant 0 : i32
    %c0_i32_1 = arith.constant 0 : i32
    return %c0_i32, %c0_i32_0 : i32, i32
  }
  func.func @transform_3(%arg0: i32, %arg1: i32) -> (i32, i32) {
    %c0_i32 = arith.constant 0 : i32
    %c0_i32_0 = arith.constant 0 : i32
    return %arg0, %c0_i32 : i32, i32
  }
}

</mosaic_0001>

<llo_original>
// kernel: tpu_custom_call.1
$region0: #{tpu_custom_call.1}
  #allocation0 [shape = 'u32[]', space=smem, size = 0x4, offset = 0x4, fixed_abs, tag = 'smem constant byte address 0x4 - core index']
  #allocation1 [shape = 'u32[144,128]{1,0:T(1,128)}', space=vmem, size = 0x12000, scoped, tag = 'internal scratch']
  #allocation2 [shape = 'f32[512,128]{1,0:T(8,128)}', space=vmem, size = 0x40000, scoped, tag = 'scratch operand']
  %s0 = inlined_call_operand.hbm [shape: bf16[512,128], index: 0, kind: input, shape index: {}]
  %s1 = inlined_call_operand.hbm [shape: bf16[128,128], index: 1, kind: input, shape index: {}]
  %s2 = inlined_call_operand.vmem [shape: f32[1,128], index: 2, kind: input, shape index: {}]
  %s3 = inlined_call_operand.hbm [shape: f32[512,128], index: 3, kind: output, shape index: {}]
  %s4 = sld [smem:[#allocation0]]
  $region38: #{tpu_custom_call.1} parent=0
    _
  %s6 = ssub.s32 1, %s4
  %s7 = scalar_select 0, %s6, %s4
  $region1: #{tpu_custom_call.1} parent=0
    #allocation3 [shape = 'u8[131072]{0}', space=vmem, size = 0x20000, scoped, tag = 'input window, operand 0, single buffered']
    #allocation4 [shape = 's32[1]{0}', space=sflag, size = 0x4, scoped, tag = 'scoped memory for tpu_custom_call.1']
    #allocation5 [shape = 's32[1]{0}', space=sflag, size = 0x4, scoped, tag = 'scoped memory for tpu_custom_call.1']
    #allocation6 [shape = 'u8[32768]{0}', space=vmem, size = 0x8000, scoped, tag = 'input window, operand 1, single buffered']
    #allocation7 [shape = 's32[1]{0}', space=sflag, size = 0x4, scoped, tag = 'scoped memory for tpu_custom_call.1']
    #allocation8 [shape = 'u8[262144]{0}', space=vmem, size = 0x40000, scoped, tag = 'output window, operand 0, single buffered']
    %8 = vsyncpa [#allocation4], 0
    %9 = vsyncpa [#allocation7], 0
    %10 = vsyncpa [#allocation5], 0
    // Predicated region
    $region2: #{tpu_custom_call.1} parent=1 // pred_check
      _
    $region3: #{tpu_custom_call.1} parent=1 // pred_check_branch
      %12 = sbr.rel (0) target = $region5
    $region4: #{tpu_custom_call.1} parent=1 // pred_region
      %s14 = ssub.s32 4096, 4096
      %15 = vsyncadd [#allocation4], %s14
      %s16 = sshll.u32 [#allocation3], 4
      %s17 = int_to_ptr.vmem [resolvable:$true] %s16
      %22 = dma.hbm_to_vmem [thread:$0]  %s0, 4096, %s17, [#allocation4], 64, 64, 4
    $region5: #{tpu_custom_call.1} parent=1 // pred_fallthru
      _
    // Predicated region
    $region6: #{tpu_custom_call.1} parent=1 // pred_check
      _
    $region7: #{tpu_custom_call.1} parent=1 // pred_check_branch
      %24 = sbr.rel (0) target = $region9
    $region8: #{tpu_custom_call.1} parent=1 // pred_region
      %s26 = ssub.s32 1024, 1024
      %27 = vsyncadd [#allocation7], %s26
      %s28 = sshll.u32 [#allocation6], 4
      %s29 = int_to_ptr.vmem [resolvable:$true] %s28
      %34 = dma.hbm_to_vmem [thread:$0]  %s1, 1024, %s29, [#allocation7], 64, 64, 4
    $region9: #{tpu_custom_call.1} parent=1 // pred_fallthru
      _
    // Predicated region
    $region10: #{tpu_custom_call.1} parent=1 // pred_check
      _
    $region11: #{tpu_custom_call.1} parent=1 // pred_check_branch
      %36 = sbr.rel (0) target = $region13
    $region12: #{tpu_custom_call.1} parent=1 // pred_region
      _
    $region13: #{tpu_custom_call.1} parent=1 // pred_fallthru
      _
    // Predicated region
    $region14: #{tpu_custom_call.1} parent=1 // pred_check
      _
    $region15: #{tpu_custom_call.1} parent=1 // pred_check_branch
      %38 = sbr.rel (0) target = $region17
    $region16: #{tpu_custom_call.1} parent=1 // pred_region
      %39 = dma.done [#allocation4], 4096
    $region17: #{tpu_custom_call.1} parent=1 // pred_fallthru
      _
    // Predicated region
    $region18: #{tpu_custom_call.1} parent=1 // pred_check
      _
    $region19: #{tpu_custom_call.1} parent=1 // pred_check_branch
      %41 = sbr.rel (0) target = $region21
    $region20: #{tpu_custom_call.1} parent=1 // pred_region
      %42 = dma.done [#allocation7], 1024
    $region21: #{tpu_custom_call.1} parent=1 // pred_fallthru
      _
    %p44 = scmp.eq.s32.totalorder 0, 0
    // Predicated region
    $region22: #{tpu_custom_call.1} parent=1 // pred_check
      %p45 = pneg %p44
    $region23: #{tpu_custom_call.1} parent=1 // pred_check_branch
      %47 = sbr.rel (%p45) target = $region25
    $region24: #{tpu_custom_call.1} parent=1 // pred_region
      %48 = vst [vmem:[#allocation2] sm:$0xff] 0.0
      %49 = vst [vmem:[#allocation2 + $0x8] sm:$0xff] 0.0
      %50 = vst [vmem:[#allocation2 + $0x10] sm:$0xff] 0.0
      %51 = vst [vmem:[#allocation2 + $0x18] sm:$0xff] 0.0
      %52 = vst [vmem:[#allocation2 + $0x20] sm:$0xff] 0.0
      %53 = vst [vmem:[#allocation2 + $0x28] sm:$0xff] 0.0
      %54 = vst [vmem:[#allocation2 + $0x30] sm:$0xff] 0.0
      %55 = vst [vmem:[#allocation2 + $0x38] sm:$0xff] 0.0
      %56 = vst [vmem:[#allocation2 + $0x40] sm:$0xff] 0.0
      %57 = vst [vmem:[#allocation2 + $0x48] sm:$0xff] 0.0
      %58 = vst [vmem:[#allocation2 + $0x50] sm:$0xff] 0.0
      %59 = vst [vmem:[#allocation2 + $0x58] sm:$0xff] 0.0
      %60 = vst [vmem:[#allocation2 + $0x60] sm:$0xff] 0.0
      %61 = vst [vmem:[#allocation2 + $0x68] sm:$0xff] 0.0
      %62 = vst [vmem:[#allocation2 + $0x70] sm:$0xff] 0.0
      %63 = vst [vmem:[#allocation2 + $0x78] sm:$0xff] 0.0
      %64 = vst [vmem:[#allocation2 + $0x80] sm:$0xff] 0.0
      %65 = vst [vmem:[#allocation2 + $0x88] sm:$0xff] 0.0
      %66 = vst [vmem:[#allocation2 + $0x90] sm:$0xff] 0.0
      %67 = vst [vmem:[#allocation2 + $0x98] sm:$0xff] 0.0
      %68 = vst [vmem:[#allocation2 + $0xa0] sm:$0xff] 0.0
      %69 = vst [vmem:[#allocation2 + $0xa8] sm:$0xff] 0.0
      %70 = vst [vmem:[#allocation2 + $0xb0] sm:$0xff] 0.0
      %71 = vst [vmem:[#allocation2 + $0xb8] sm:$0xff] 0.0
      %72 = vst [vmem:[#allocation2 + $0xc0] sm:$0xff] 0.0
      %73 = vst [vmem:[#allocation2 + $0xc8] sm:$0xff] 0.0
      %74 = vst [vmem:[#allocation2 + $0xd0] sm:$0xff] 0.0
      %75 = vst [vmem:[#allocation2 + $0xd8] sm:$0xff] 0.0
      %76 = vst [vmem:[#allocation2 + $0xe0] sm:$0xff] 0.0
      %77 = vst [vmem:[#allocation2 + $0xe8] sm:$0xff] 0.0
      %78 = vst [vmem:[#allocation2 + $0xf0] sm:$0xff] 0.0
      %79 = vst [vmem:[#allocation2 + $0xf8] sm:$0xff] 0.0
      %80 = vst [vmem:[#allocation2 + $0x100] sm:$0xff] 0.0
      %81 = vst [vmem:[#allocation2 + $0x108] sm:$0xff] 0.0
      %82 = vst [vmem:[#allocation2 + $0x110] sm:$0xff] 0.0
      %83 = vst [vmem:[#allocation2 + $0x118] sm:$0xff] 0.0
      %84 = vst [vmem:[#allocation2 + $0x120] sm:$0xff] 0.0
      %85 = vst [vmem:[#allocation2 + $0x128] sm:$0xff] 0.0
      %86 = vst [vmem:[#allocation2 + $0x130] sm:$0xff] 0.0
      %87 = vst [vmem:[#allocation2 + $0x138] sm:$0xff] 0.0
      %88 = vst [vmem:[#allocation2 + $0x140] sm:$0xff] 0.0
      %89 = vst [vmem:[#allocation2 + $0x148] sm:$0xff] 0.0
      %90 = vst [vmem:[#allocation2 + $0x150] sm:$0xff] 0.0
      %91 = vst [vmem:[#allocation2 + $0x158] sm:$0xff] 0.0
      %92 = vst [vmem:[#allocation2 + $0x160] sm:$0xff] 0.0
      %93 = vst [vmem:[#allocation2 + $0x168] sm:$0xff] 0.0
      %94 = vst [vmem:[#allocation2 + $0x170] sm:$0xff] 0.0
      %95 = vst [vmem:[#allocation2 + $0x178] sm:$0xff] 0.0
      %96 = vst [vmem:[#allocation2 + $0x180] sm:$0xff] 0.0
      %97 = vst [vmem:[#allocation2 + $0x188] sm:$0xff] 0.0
      %98 = vst [vmem:[#allocation2 + $0x190] sm:$0xff] 0.0
      %99 = vst [vmem:[#allocation2 + $0x198] sm:$0xff] 0.0
      %100 = vst [vmem:[#allocation2 + $0x1a0] sm:$0xff] 0.0
      %101 = vst [vmem:[#allocation2 + $0x1a8] sm:$0xff] 0.0
      %102 = vst [vmem:[#allocation2 + $0x1b0] sm:$0xff] 0.0
      %103 = vst [vmem:[#allocation2 + $0x1b8] sm:$0xff] 0.0
      %104 = vst [vmem:[#allocation2 + $0x1c0] sm:$0xff] 0.0
      %105 = vst [vmem:[#allocation2 + $0x1c8] sm:$0xff] 0.0
      %106 = vst [vmem:[#allocation2 + $0x1d0] sm:$0xff] 0.0
      %107 = vst [vmem:[#allocation2 + $0x1d8] sm:$0xff] 0.0
      %108 = vst [vmem:[#allocation2 + $0x1e0] sm:$0xff] 0.0
      %109 = vst [vmem:[#allocation2 + $0x1e8] sm:$0xff] 0.0
      %110 = vst [vmem:[#allocation2 + $0x1f0] sm:$0xff] 0.0
      %111 = vst [vmem:[#allocation2 + $0x1f8] sm:$0xff] 0.0
    $region25: #{tpu_custom_call.1} parent=1 // pred_fallthru
      _
    %v112 = vld [vmem:[#allocation2] sm:$0xff]
    %v113 = vld [vmem:[#allocation2 + $0x8] sm:$0xff]
    %v114 = vld [vmem:[#allocation2 + $0x10] sm:$0xff]
    %v115 = vld [vmem:[#allocation2 + $0x18] sm:$0xff]
    %v116 = vld [vmem:[#allocation2 + $0x20] sm:$0xff]
    %v117 = vld [vmem:[#allocation2 + $0x28] sm:$0xff]
    %v118 = vld [vmem:[#allocation2 + $0x30] sm:$0xff]
    %v119 = vld [vmem:[#allocation2 + $0x38] sm:$0xff]
    %v120 = vld [vmem:[#allocation2 + $0x40] sm:$0xff]
    %v121 = vld [vmem:[#allocation2 + $0x48] sm:$0xff]
    %v122 = vld [vmem:[#allocation2 + $0x50] sm:$0xff]
    %v123 = vld [vmem:[#allocation2 + $0x58] sm:$0xff]
    %v124 = vld [vmem:[#allocation2 + $0x60] sm:$0xff]
    %v125 = vld [vmem:[#allocation2 + $0x68] sm:$0xff]
    %v126 = vld [vmem:[#allocation2 + $0x70] sm:$0xff]
    %v127 = vld [vmem:[#allocation2 + $0x78] sm:$0xff]
    %v128 = vld [vmem:[#allocation2 + $0x80] sm:$0xff]
    %v129 = vld [vmem:[#allocation2 + $0x88] sm:$0xff]
    %v130 = vld [vmem:[#allocation2 + $0x90] sm:$0xff]
    %v131 = vld [vmem:[#allocation2 + $0x98] sm:$0xff]
    %v132 = vld [vmem:[#allocation2 + $0xa0] sm:$0xff]
    %v133 = vld [vmem:[#allocation2 + $0xa8] sm:$0xff]
    %v134 = vld [vmem:[#allocation2 + $0xb0] sm:$0xff]
    %v135 = vld [vmem:[#allocation2 + $0xb8] sm:$0xff]
    %v136 = vld [vmem:[#allocation2 + $0xc0] sm:$0xff]
    %v137 = vld [vmem:[#allocation2 + $0xc8] sm:$0xff]
    %v138 = vld [vmem:[#allocation2 + $0xd0] sm:$0xff]
    %v139 = vld [vmem:[#allocation2 + $0xd8] sm:$0xff]
    %v140 = vld [vmem:[#allocation2 + $0xe0] sm:$0xff]
    %v141 = vld [vmem:[#allocation2 + $0xe8] sm:$0xff]
    %v142 = vld [vmem:[#allocation2 + $0xf0] sm:$0xff]
    %v143 = vld [vmem:[#allocation2 + $0xf8] sm:$0xff]
    %v144 = vld [vmem:[#allocation2 + $0x100] sm:$0xff]
    %v145 = vld [vmem:[#allocation2 + $0x108] sm:$0xff]
    %v146 = vld [vmem:[#allocation2 + $0x110] sm:$0xff]
    %v147 = vld [vmem:[#allocation2 + $0x118] sm:$0xff]
    %v148 = vld [vmem:[#allocation2 + $0x120] sm:$0xff]
    %v149 = vld [vmem:[#allocation2 + $0x128] sm:$0xff]
    %v150 = vld [vmem:[#allocation2 + $0x130] sm:$0xff]
    %v151 = vld [vmem:[#allocation2 + $0x138] sm:$0xff]
    %v152 = vld [vmem:[#allocation2 + $0x140] sm:$0xff]
    %v153 = vld [vmem:[#allocation2 + $0x148] sm:$0xff]
    %v154 = vld [vmem:[#allocation2 + $0x150] sm:$0xff]
    %v155 = vld [vmem:[#allocation2 + $0x158] sm:$0xff]
    %v156 = vld [vmem:[#allocation2 + $0x160] sm:$0xff]
    %v157 = vld [vmem:[#allocation2 + $0x168] sm:$0xff]
    %v158 = vld [vmem:[#allocation2 + $0x170] sm:$0xff]
    %v159 = vld [vmem:[#allocation2 + $0x178] sm:$0xff]
    %v160 = vld [vmem:[#allocation2 + $0x180] sm:$0xff]
    %v161 = vld [vmem:[#allocation2 + $0x188] sm:$0xff]
    %v162 = vld [vmem:[#allocation2 + $0x190] sm:$0xff]
    %v163 = vld [vmem:[#allocation2 + $0x198] sm:$0xff]
    %v164 = vld [vmem:[#allocation2 + $0x1a0] sm:$0xff]
    %v165 = vld [vmem:[#allocation2 + $0x1a8] sm:$0xff]
    %v166 = vld [vmem:[#allocation2 + $0x1b0] sm:$0xff]
    %v167 = vld [vmem:[#allocation2 + $0x1b8] sm:$0xff]
    %v168 = vld [vmem:[#allocation2 + $0x1c0] sm:$0xff]
    %v169 = vld [vmem:[#allocation2 + $0x1c8] sm:$0xff]
    %v170 = vld [vmem:[#allocation2 + $0x1d0] sm:$0xff]
    %v171 = vld [vmem:[#allocation2 + $0x1d8] sm:$0xff]
    %v172 = vld [vmem:[#allocation2 + $0x1e0] sm:$0xff]
    %v173 = vld [vmem:[#allocation2 + $0x1e8] sm:$0xff]
    %v174 = vld [vmem:[#allocation2 + $0x1f0] sm:$0xff]
    %v175 = vld [vmem:[#allocation2 + $0x1f8] sm:$0xff]
    %v176 = vld [vmem:[#allocation3] sm:$0xf]
    %v177 = vld [vmem:[#allocation3 + $0x4] sm:$0xf]
    %v178 = vld [vmem:[#allocation3 + $0x8] sm:$0xf]
    %v179 = vld [vmem:[#allocation3 + $0xc] sm:$0xf]
    %v180 = vld [vmem:[#allocation3 + $0x10] sm:$0xf]
    %v181 = vld [vmem:[#allocation3 + $0x14] sm:$0xf]
    %v182 = vld [vmem:[#allocation3 + $0x18] sm:$0xf]
    %v183 = vld [vmem:[#allocation3 + $0x1c] sm:$0xf]
    %v184 = vld [vmem:[#allocation3 + $0x20] sm:$0xf]
    %v185 = vld [vmem:[#allocation3 + $0x24] sm:$0xf]
    %v186 = vld [vmem:[#allocation3 + $0x28] sm:$0xf]
    %v187 = vld [vmem:[#allocation3 + $0x2c] sm:$0xf]
    %v188 = vld [vmem:[#allocation3 + $0x30] sm:$0xf]
    %v189 = vld [vmem:[#allocation3 + $0x34] sm:$0xf]
    %v190 = vld [vmem:[#allocation3 + $0x38] sm:$0xf]
    %v191 = vld [vmem:[#allocation3 + $0x3c] sm:$0xf]
    %v192 = vld [vmem:[#allocation3 + $0x40] sm:$0xf]
    %v193 = vld [vmem:[#allocation3 + $0x44] sm:$0xf]
    %v194 = vld [vmem:[#allocation3 + $0x48] sm:$0xf]
    %v195 = vld [vmem:[#allocation3 + $0x4c] sm:$0xf]
    %v196 = vld [vmem:[#allocation3 + $0x50] sm:$0xf]
    %v197 = vld [vmem:[#allocation3 + $0x54] sm:$0xf]
    %v198 = vld [vmem:[#allocation3 + $0x58] sm:$0xf]
    %v199 = vld [vmem:[#allocation3 + $0x5c] sm:$0xf]
    %v200 = vld [vmem:[#allocation3 + $0x60] sm:$0xf]
    %v201 = vld [vmem:[#allocation3 + $0x64] sm:$0xf]
    %v202 = vld [vmem:[#allocation3 + $0x68] sm:$0xf]
    %v203 = vld [vmem:[#allocation3 + $0x6c] sm:$0xf]
    %v204 = vld [vmem:[#allocation3 + $0x70] sm:$0xf]
    %v205 = vld [vmem:[#allocation3 + $0x74] sm:$0xf]
    %v206 = vld [vmem:[#allocation3 + $0x78] sm:$0xf]
    %v207 = vld [vmem:[#allocation3 + $0x7c] sm:$0xf]
    %v208 = vld [vmem:[#allocation3 + $0x80] sm:$0xf]
    %v209 = vld [vmem:[#allocation3 + $0x84] sm:$0xf]
    %v210 = vld [vmem:[#allocation3 + $0x88] sm:$0xf]
    %v211 = vld [vmem:[#allocation3 + $0x8c] sm:$0xf]
    %v212 = vld [vmem:[#allocation3 + $0x90] sm:$0xf]
    %v213 = vld [vmem:[#allocation3 + $0x94] sm:$0xf]
    %v214 = vld [vmem:[#allocation3 + $0x98] sm:$0xf]
    %v215 = vld [vmem:[#allocation3 + $0x9c] sm:$0xf]
    %v216 = vld [vmem:[#allocation3 + $0xa0] sm:$0xf]
    %v217 = vld [vmem:[#allocation3 + $0xa4] sm:$0xf]
    %v218 = vld [vmem:[#allocation3 + $0xa8] sm:$0xf]
    %v219 = vld [vmem:[#allocation3 + $0xac] sm:$0xf]
    %v220 = vld [vmem:[#allocation3 + $0xb0] sm:$0xf]
    %v221 = vld [vmem:[#allocation3 + $0xb4] sm:$0xf]
    %v222 = vld [vmem:[#allocation3 + $0xb8] sm:$0xf]
    %v223 = vld [vmem:[#allocation3 + $0xbc] sm:$0xf]
    %v224 = vld [vmem:[#allocation3 + $0xc0] sm:$0xf]
    %v225 = vld [vmem:[#allocation3 + $0xc4] sm:$0xf]
    %v226 = vld [vmem:[#allocation3 + $0xc8] sm:$0xf]
    %v227 = vld [vmem:[#allocation3 + $0xcc] sm:$0xf]
    %v228 = vld [vmem:[#allocation3 + $0xd0] sm:$0xf]
    %v229 = vld [vmem:[#allocation3 + $0xd4] sm:$0xf]
    %v230 = vld [vmem:[#allocation3 + $0xd8] sm:$0xf]
    %v231 = vld [vmem:[#allocation3 + $0xdc] sm:$0xf]
    %v232 = vld [vmem:[#allocation3 + $0xe0] sm:$0xf]
    %v233 = vld [vmem:[#allocation3 + $0xe4] sm:$0xf]
    %v234 = vld [vmem:[#allocation3 + $0xe8] sm:$0xf]
    %v235 = vld [vmem:[#allocation3 + $0xec] sm:$0xf]
    %v236 = vld [vmem:[#allocation3 + $0xf0] sm:$0xf]
    %v237 = vld [vmem:[#allocation3 + $0xf4] sm:$0xf]
    %v238 = vld [vmem:[#allocation3 + $0xf8] sm:$0xf]
    %v239 = vld [vmem:[#allocation3 + $0xfc] sm:$0xf]
    %v240 = vld [vmem:[#allocation6] sm:$0xf]
    %v241 = vld [vmem:[#allocation6 + $0x4] sm:$0xf]
    %v242 = vld [vmem:[#allocation6 + $0x8] sm:$0xf]
    %v243 = vld [vmem:[#allocation6 + $0xc] sm:$0xf]
    %v244 = vld [vmem:[#allocation6 + $0x10] sm:$0xf]
    %v245 = vld [vmem:[#allocation6 + $0x14] sm:$0xf]
    %v246 = vld [vmem:[#allocation6 + $0x18] sm:$0xf]
    %v247 = vld [vmem:[#allocation6 + $0x1c] sm:$0xf]
    %v248 = vld [vmem:[#allocation6 + $0x20] sm:$0xf]
    %v249 = vld [vmem:[#allocation6 + $0x24] sm:$0xf]
    %v250 = vld [vmem:[#allocation6 + $0x28] sm:$0xf]
    %v251 = vld [vmem:[#allocation6 + $0x2c] sm:$0xf]
    %v252 = vld [vmem:[#allocation6 + $0x30] sm:$0xf]
    %v253 = vld [vmem:[#allocation6 + $0x34] sm:$0xf]
    %v254 = vld [vmem:[#allocation6 + $0x38] sm:$0xf]
    %v255 = vld [vmem:[#allocation6 + $0x3c] sm:$0xf]
    %v320 = vunpack.c.l.b16 %v176
    %v321 = vunpack.c.l.b16 %v177
    %v322 = vunpack.c.l.b16 %v178
    %v323 = vunpack.c.l.b16 %v179
    %v324 = vunpack.c.l.b16 %v180
    %v325 = vunpack.c.l.b16 %v181
    %v326 = vunpack.c.l.b16 %v182
    %v327 = vunpack.c.l.b16 %v183
    %v328 = vunpack.c.l.b16 %v184
    %v329 = vunpack.c.l.b16 %v185
    %v330 = vunpack.c.l.b16 %v186
    %v331 = vunpack.c.l.b16 %v187
    %v332 = vunpack.c.l.b16 %v188
    %v333 = vunpack.c.l.b16 %v189
    %v334 = vunpack.c.l.b16 %v190
    %v335 = vunpack.c.l.b16 %v191
    %v336 = vunpack.c.l.b16 %v192
    %v337 = vunpack.c.l.b16 %v193
    %v338 = vunpack.c.l.b16 %v194
    %v339 = vunpack.c.l.b16 %v195
    %v340 = vunpack.c.l.b16 %v196
    %v341 = vunpack.c.l.b16 %v197
    %v342 = vunpack.c.l.b16 %v198
    %v343 = vunpack.c.l.b16 %v199
    %v344 = vunpack.c.l.b16 %v200
    %v345 = vunpack.c.l.b16 %v201
    %v346 = vunpack.c.l.b16 %v202
    %v347 = vunpack.c.l.b16 %v203
    %v348 = vunpack.c.l.b16 %v204
    %v349 = vunpack.c.l.b16 %v205
    %v350 = vunpack.c.l.b16 %v206
    %v351 = vunpack.c.l.b16 %v207
    %v352 = vunpack.c.l.b16 %v208
    %v353 = vunpack.c.l.b16 %v209
    %v354 = vunpack.c.l.b16 %v210
    %v355 = vunpack.c.l.b16 %v211
    %v356 = vunpack.c.l.b16 %v212
    %v357 = vunpack.c.l.b16 %v213
    %v358 = vunpack.c.l.b16 %v214
    %v359 = vunpack.c.l.b16 %v215
    %v360 = vunpack.c.l.b16 %v216
    %v361 = vunpack.c.l.b16 %v217
    %v362 = vunpack.c.l.b16 %v218
    %v363 = vunpack.c.l.b16 %v219
    %v364 = vunpack.c.l.b16 %v220
    %v365 = vunpack.c.l.b16 %v221
    %v366 = vunpack.c.l.b16 %v222
    %v367 = vunpack.c.l.b16 %v223
    %v368 = vunpack.c.l.b16 %v224
    %v369 = vunpack.c.l.b16 %v225
    %v370 = vunpack.c.l.b16 %v226
    %v371 = vunpack.c.l.b16 %v227
    %v372 = vunpack.c.l.b16 %v228
    %v373 = vunpack.c.l.b16 %v229
    %v374 = vunpack.c.l.b16 %v230
    %v375 = vunpack.c.l.b16 %v231
    %v376 = vunpack.c.l.b16 %v232
    %v377 = vunpack.c.l.b16 %v233
    %v378 = vunpack.c.l.b16 %v234
    %v379 = vunpack.c.l.b16 %v235
    %v380 = vunpack.c.l.b16 %v236
    %v381 = vunpack.c.l.b16 %v237
    %v382 = vunpack.c.l.b16 %v238
    %v383 = vunpack.c.l.b16 %v239
    %v384 = vpack.c.b16 %v321, %v320
    %v385 = vpack.c.b16 %v323, %v322
    %v386 = vpack.c.b16 %v325, %v324
    %v387 = vpack.c.b16 %v327, %v326
    %v388 = vpack.c.b16 %v329, %v328
    %v389 = vpack.c.b16 %v331, %v330
    %v390 = vpack.c.b16 %v333, %v332
    %v391 = vpack.c.b16 %v335, %v334
    %v392 = vpack.c.b16 %v337, %v336
    %v393 = vpack.c.b16 %v339, %v338
    %v394 = vpack.c.b16 %v341, %v340
    %v395 = vpack.c.b16 %v343, %v342
    %v396 = vpack.c.b16 %v345, %v344
    %v397 = vpack.c.b16 %v347, %v346
    %v398 = vpack.c.b16 %v349, %v348
    %v399 = vpack.c.b16 %v351, %v350
    %v400 = vpack.c.b16 %v353, %v352
    %v401 = vpack.c.b16 %v355, %v354
    %v402 = vpack.c.b16 %v357, %v356
    %v403 = vpack.c.b16 %v359, %v358
    %v404 = vpack.c.b16 %v361, %v360
    %v405 = vpack.c.b16 %v363, %v362
    %v406 = vpack.c.b16 %v365, %v364
    %v407 = vpack.c.b16 %v367, %v366
    %v408 = vpack.c.b16 %v369, %v368
    %v409 = vpack.c.b16 %v371, %v370
    %v410 = vpack.c.b16 %v373, %v372
    %v411 = vpack.c.b16 %v375, %v374
    %v412 = vpack.c.b16 %v377, %v376
    %v413 = vpack.c.b16 %v379, %v378
    %v414 = vpack.c.b16 %v381, %v380
    %v415 = vpack.c.b16 %v383, %v382
    %v464 = vunpack.c.l.b16 %v240
    %v465 = vunpack.c.l.b16 %v241
    %v466 = vunpack.c.l.b16 %v242
    %v467 = vunpack.c.l.b16 %v243
    %v468 = vunpack.c.l.b16 %v244
    %v469 = vunpack.c.l.b16 %v245
    %v470 = vunpack.c.l.b16 %v246
    %v471 = vunpack.c.l.b16 %v247
    %v472 = vunpack.c.l.b16 %v248
    %v473 = vunpack.c.l.b16 %v249
    %v474 = vunpack.c.l.b16 %v250
    %v475 = vunpack.c.l.b16 %v251
    %v476 = vunpack.c.l.b16 %v252
    %v477 = vunpack.c.l.b16 %v253
    %v478 = vunpack.c.l.b16 %v254
    %v479 = vunpack.c.l.b16 %v255
    %v480 = vpack.c.b16 %v465, %v464
    %v481 = vpack.c.b16 %v467, %v466
    %v482 = vpack.c.b16 %v469, %v468
    %v483 = vpack.c.b16 %v471, %v470
    %v484 = vpack.c.b16 %v473, %v472
    %v485 = vpack.c.b16 %v475, %v474
    %v486 = vpack.c.b16 %v477, %v476
    %v487 = vpack.c.b16 %v479, %v478
    %496 = vmatprep.subr.bf16.mxu0 0
    %497 = vmatpush1.bf16.msra.mxu0 %v487
    %498 = vmatprep.subr.bf16.mxu0 0
    %499 = vmatpush1.bf16.msra.mxu0 %v486
    %500 = vmatprep.subr.bf16.mxu0 0
    %501 = vmatpush1.bf16.msra.mxu0 %v485
    %502 = vmatprep.subr.bf16.mxu0 0
    %503 = vmatpush1.bf16.msra.mxu0 %v484
    %504 = vmatprep.subr.bf16.mxu0 0
    %505 = vmatpush1.bf16.msra.mxu0 %v483
    %506 = vmatprep.subr.bf16.mxu0 0
    %507 = vmatpush1.bf16.msra.mxu0 %v482
    %508 = vmatprep.subr.bf16.mxu0 0
    %509 = vmatpush1.bf16.msra.mxu0 %v481
    %510 = vmatprep.subr.bf16.mxu0 0
    %511 = vmatpush1.bf16.msra.mxu0 %v480
    %512 = vmatprep.subr.bf16.mxu0 0
    %513 = vmatpush2.bf16.msra.mxu0 0
    %514 = vmatprep.subr.bf16.mxu0 0
    %515 = vmatpush2.bf16.msra.mxu0 0
    %516 = vmatprep.subr.bf16.mxu0 0
    %517 = vmatpush2.bf16.msra.mxu0 0
    %518 = vmatprep.subr.bf16.mxu0 0
    %519 = vmatpush2.bf16.msra.mxu0 0
    %520 = vmatprep.subr.bf16.mxu0 0
    %521 = vmatpush2.bf16.msra.mxu0 0
    %522 = vmatprep.subr.bf16.mxu0 0
    %523 = vmatpush2.bf16.msra.mxu0 0
    %524 = vmatprep.subr.bf16.mxu0 0
    %525 = vmatpush2.bf16.msra.mxu0 0
    %526 = vmatprep.subr.bf16.mxu0 0
    %527 = vmatpush2.bf16.msra.mxu0 0
    %528 = vmatprep.mubr.bf16.mxu0 0
    %529 = vmatmul.mubr.bf16.gmra.mxu0 %v384
    %v530 = vpop.f32.mrf.mxu0
    %v531 = vadd.f32 0.0, %v530
    %v532 = vpop.f32.mrf.mxu0
    %v533 = vpop.f32.mrf.mxu0
    %v534 = vadd.f32 0.0, %v533
    %v535 = vpop.f32.mrf.mxu0
    %536 = vmatprep.mubr.bf16.mxu0 0
    %537 = vmatmul.mubr.bf16.gmra.mxu0 %v385
    %v538 = vpop.f32.mrf.mxu0
    %v539 = vadd.f32 0.0, %v538
    %v540 = vpop.f32.mrf.mxu0
    %v541 = vpop.f32.mrf.mxu0
    %v542 = vadd.f32 0.0, %v541
    %v543 = vpop.f32.mrf.mxu0
    %544 = vmatprep.mubr.bf16.mxu0 0
    %545 = vmatmul.mubr.bf16.gmra.mxu0 %v386
    %v546 = vpop.f32.mrf.mxu0
    %v547 = vadd.f32 0.0, %v546
    %v548 = vpop.f32.mrf.mxu0
    %v549 = vpop.f32.mrf.mxu0
    %v550 = vadd.f32 0.0, %v549
    %v551 = vpop.f32.mrf.mxu0
    %552 = vmatprep.mubr.bf16.mxu0 0
    %553 = vmatmul.mubr.bf16.gmra.mxu0 %v387
    %v554 = vpop.f32.mrf.mxu0
    %v555 = vadd.f32 0.0, %v554
    %v556 = vpop.f32.mrf.mxu0
    %v557 = vpop.f32.mrf.mxu0
    %v558 = vadd.f32 0.0, %v557
    %v559 = vpop.f32.mrf.mxu0
    %560 = vmatprep.mubr.bf16.mxu0 0
    %561 = vmatmul.mubr.bf16.gmra.mxu0 %v388
    %v562 = vpop.f32.mrf.mxu0
    %v563 = vadd.f32 0.0, %v562
    %v564 = vpop.f32.mrf.mxu0
    %v565 = vpop.f32.mrf.mxu0
    %v566 = vadd.f32 0.0, %v565
    %v567 = vpop.f32.mrf.mxu0
    %568 = vmatprep.mubr.bf16.mxu0 0
    %569 = vmatmul.mubr.bf16.gmra.mxu0 %v389
    %v570 = vpop.f32.mrf.mxu0
    %v571 = vadd.f32 0.0, %v570
    %v572 = vpop.f32.mrf.mxu0
    %v573 = vpop.f32.mrf.mxu0
    %v574 = vadd.f32 0.0, %v573
    %v575 = vpop.f32.mrf.mxu0
    %576 = vmatprep.mubr.bf16.mxu0 0
    %577 = vmatmul.mubr.bf16.gmra.mxu0 %v390
    %v578 = vpop.f32.mrf.mxu0
    %v579 = vadd.f32 0.0, %v578
    %v580 = vpop.f32.mrf.mxu0
    %v581 = vpop.f32.mrf.mxu0
    %v582 = vadd.f32 0.0, %v581
    %v583 = vpop.f32.mrf.mxu0
    %584 = vmatprep.mubr.bf16.mxu0 0
    %585 = vmatmul.mubr.bf16.gmra.mxu0 %v391
    %v586 = vpop.f32.mrf.mxu0
    %v587 = vadd.f32 0.0, %v586
    %v588 = vpop.f32.mrf.mxu0
    %v589 = vpop.f32.mrf.mxu0
    %v590 = vadd.f32 0.0, %v589
    %v591 = vpop.f32.mrf.mxu0
    %592 = vmatprep.mubr.bf16.mxu0 0
    %593 = vmatmul.mubr.bf16.gmra.mxu0 %v392
    %v594 = vpop.f32.mrf.mxu0
    %v595 = vadd.f32 0.0, %v594
    %v596 = vpop.f32.mrf.mxu0
    %v597 = vpop.f32.mrf.mxu0
    %v598 = vadd.f32 0.0, %v597
    %v599 = vpop.f32.mrf.mxu0
    %600 = vmatprep.mubr.bf16.mxu0 0
    %601 = vmatmul.mubr.bf16.gmra.mxu0 %v393
    %v602 = vpop.f32.mrf.mxu0
    %v603 = vadd.f32 0.0, %v602
    %v604 = vpop.f32.mrf.mxu0
    %v605 = vpop.f32.mrf.mxu0
    %v606 = vadd.f32 0.0, %v605
    %v607 = vpop.f32.mrf.mxu0
    %608 = vmatprep.mubr.bf16.mxu0 0
    %609 = vmatmul.mubr.bf16.gmra.mxu0 %v394
    %v610 = vpop.f32.mrf.mxu0
    %v611 = vadd.f32 0.0, %v610
    %v612 = vpop.f32.mrf.mxu0
    %v613 = vpop.f32.mrf.mxu0
    %v614 = vadd.f32 0.0, %v613
    %v615 = vpop.f32.mrf.mxu0
    %616 = vmatprep.mubr.bf16.mxu0 0
    %617 = vmatmul.mubr.bf16.gmra.mxu0 %v395
    %v618 = vpop.f32.mrf.mxu0
    %v619 = vadd.f32 0.0, %v618
    %v620 = vpop.f32.mrf.mxu0
    %v621 = vpop.f32.mrf.mxu0
    %v622 = vadd.f32 0.0, %v621
    %v623 = vpop.f32.mrf.mxu0
    %624 = vmatprep.mubr.bf16.mxu0 0
    %625 = vmatmul.mubr.bf16.gmra.mxu0 %v396
    %v626 = vpop.f32.mrf.mxu0
    %v627 = vadd.f32 0.0, %v626
    %v628 = vpop.f32.mrf.mxu0
    %v629 = vpop.f32.mrf.mxu0
    %v630 = vadd.f32 0.0, %v629
    %v631 = vpop.f32.mrf.mxu0
    %632 = vmatprep.mubr.bf16.mxu0 0
    %633 = vmatmul.mubr.bf16.gmra.mxu0 %v397
    %v634 = vpop.f32.mrf.mxu0
    %v635 = vadd.f32 0.0, %v634
    %v636 = vpop.f32.mrf.mxu0
    %v637 = vpop.f32.mrf.mxu0
    %v638 = vadd.f32 0.0, %v637
    %v639 = vpop.f32.mrf.mxu0
    %640 = vmatprep.mubr.bf16.mxu0 0
    %641 = vmatmul.mubr.bf16.gmra.mxu0 %v398
    %v642 = vpop.f32.mrf.mxu0
    %v643 = vadd.f32 0.0, %v642
    %v644 = vpop.f32.mrf.mxu0
    %v645 = vpop.f32.mrf.mxu0
    %v646 = vadd.f32 0.0, %v645
    %v647 = vpop.f32.mrf.mxu0
    %648 = vmatprep.mubr.bf16.mxu0 0
    %649 = vmatmul.mubr.bf16.gmra.mxu0 %v399
    %v650 = vpop.f32.mrf.mxu0
    %v651 = vadd.f32 0.0, %v650
    %v652 = vpop.f32.mrf.mxu0
    %v653 = vpop.f32.mrf.mxu0
    %v654 = vadd.f32 0.0, %v653
    %v655 = vpop.f32.mrf.mxu0
    %656 = vmatprep.mubr.bf16.mxu0 0
    %657 = vmatmul.mubr.bf16.gmra.mxu0 %v400
    %v658 = vpop.f32.mrf.mxu0
    %v659 = vadd.f32 0.0, %v658
    %v660 = vpop.f32.mrf.mxu0
    %v661 = vpop.f32.mrf.mxu0
    %v662 = vadd.f32 0.0, %v661
    %v663 = vpop.f32.mrf.mxu0
    %664 = vmatprep.mubr.bf16.mxu0 0
    %665 = vmatmul.mubr.bf16.gmra.mxu0 %v401
    %v666 = vpop.f32.mrf.mxu0
    %v667 = vadd.f32 0.0, %v666
    %v668 = vpop.f32.mrf.mxu0
    %v669 = vpop.f32.mrf.mxu0
    %v670 = vadd.f32 0.0, %v669
    %v671 = vpop.f32.mrf.mxu0
    %672 = vmatprep.mubr.bf16.mxu0 0
    %673 = vmatmul.mubr.bf16.gmra.mxu0 %v402
    %v674 = vpop.f32.mrf.mxu0
    %v675 = vadd.f32 0.0, %v674
    %v676 = vpop.f32.mrf.mxu0
    %v677 = vpop.f32.mrf.mxu0
    %v678 = vadd.f32 0.0, %v677
    %v679 = vpop.f32.mrf.mxu0
    %680 = vmatprep.mubr.bf16.mxu0 0
    %681 = vmatmul.mubr.bf16.gmra.mxu0 %v403
    %v682 = vpop.f32.mrf.mxu0
    %v683 = vadd.f32 0.0, %v682
    %v684 = vpop.f32.mrf.mxu0
    %v685 = vpop.f32.mrf.mxu0
    %v686 = vadd.f32 0.0, %v685
    %v687 = vpop.f32.mrf.mxu0
    %688 = vmatprep.mubr.bf16.mxu0 0
    %689 = vmatmul.mubr.bf16.gmra.mxu0 %v404
    %v690 = vpop.f32.mrf.mxu0
    %v691 = vadd.f32 0.0, %v690
    %v692 = vpop.f32.mrf.mxu0
    %v693 = vpop.f32.mrf.mxu0
    %v694 = vadd.f32 0.0, %v693
    %v695 = vpop.f32.mrf.mxu0
    %696 = vmatprep.mubr.bf16.mxu0 0
    %697 = vmatmul.mubr.bf16.gmra.mxu0 %v405
    %v698 = vpop.f32.mrf.mxu0
    %v699 = vadd.f32 0.0, %v698
    %v700 = vpop.f32.mrf.mxu0
    %v701 = vpop.f32.mrf.mxu0
    %v702 = vadd.f32 0.0, %v701
    %v703 = vpop.f32.mrf.mxu0
    %704 = vmatprep.mubr.bf16.mxu0 0
    %705 = vmatmul.mubr.bf16.gmra.mxu0 %v406
    %v706 = vpop.f32.mrf.mxu0
    %v707 = vadd.f32 0.0, %v706
    %v708 = vpop.f32.mrf.mxu0
    %v709 = vpop.f32.mrf.mxu0
    %v710 = vadd.f32 0.0, %v709
    %v711 = vpop.f32.mrf.mxu0
    %712 = vmatprep.mubr.bf16.mxu0 0
    %713 = vmatmul.mubr.bf16.gmra.mxu0 %v407
    %v714 = vpop.f32.mrf.mxu0
    %v715 = vadd.f32 0.0, %v714
    %v716 = vpop.f32.mrf.mxu0
    %v717 = vpop.f32.mrf.mxu0
    %v718 = vadd.f32 0.0, %v717
    %v719 = vpop.f32.mrf.mxu0
    %720 = vmatprep.mubr.bf16.mxu0 0
    %721 = vmatmul.mubr.bf16.gmra.mxu0 %v408
    %v722 = vpop.f32.mrf.mxu0
    %v723 = vadd.f32 0.0, %v722
    %v724 = vpop.f32.mrf.mxu0
    %v725 = vpop.f32.mrf.mxu0
    %v726 = vadd.f32 0.0, %v725
    %v727 = vpop.f32.mrf.mxu0
    %728 = vmatprep.mubr.bf16.mxu0 0
    %729 = vmatmul.mubr.bf16.gmra.mxu0 %v409
    %v730 = vpop.f32.mrf.mxu0
    %v731 = vadd.f32 0.0, %v730
    %v732 = vpop.f32.mrf.mxu0
    %v733 = vpop.f32.mrf.mxu0
    %v734 = vadd.f32 0.0, %v733
    %v735 = vpop.f32.mrf.mxu0
    %736 = vmatprep.mubr.bf16.mxu0 0
    %737 = vmatmul.mubr.bf16.gmra.mxu0 %v410
    %v738 = vpop.f32.mrf.mxu0
    %v739 = vadd.f32 0.0, %v738
    %v740 = vpop.f32.mrf.mxu0
    %v741 = vpop.f32.mrf.mxu0
    %v742 = vadd.f32 0.0, %v741
    %v743 = vpop.f32.mrf.mxu0
    %744 = vmatprep.mubr.bf16.mxu0 0
    %745 = vmatmul.mubr.bf16.gmra.mxu0 %v411
    %v746 = vpop.f32.mrf.mxu0
    %v747 = vadd.f32 0.0, %v746
    %v748 = vpop.f32.mrf.mxu0
    %v749 = vpop.f32.mrf.mxu0
    %v750 = vadd.f32 0.0, %v749
    %v751 = vpop.f32.mrf.mxu0
    %752 = vmatprep.mubr.bf16.mxu0 0
    %753 = vmatmul.mubr.bf16.gmra.mxu0 %v412
    %v754 = vpop.f32.mrf.mxu0
    %v755 = vadd.f32 0.0, %v754
    %v756 = vpop.f32.mrf.mxu0
    %v757 = vpop.f32.mrf.mxu0
    %v758 = vadd.f32 0.0, %v757
    %v759 = vpop.f32.mrf.mxu0
    %760 = vmatprep.mubr.bf16.mxu0 0
    %761 = vmatmul.mubr.bf16.gmra.mxu0 %v413
    %v762 = vpop.f32.mrf.mxu0
    %v763 = vadd.f32 0.0, %v762
    %v764 = vpop.f32.mrf.mxu0
    %v765 = vpop.f32.mrf.mxu0
    %v766 = vadd.f32 0.0, %v765
    %v767 = vpop.f32.mrf.mxu0
    %768 = vmatprep.mubr.bf16.mxu0 0
    %769 = vmatmul.mubr.bf16.gmra.mxu0 %v414
    %v770 = vpop.f32.mrf.mxu0
    %v771 = vadd.f32 0.0, %v770
    %v772 = vpop.f32.mrf.mxu0
    %v773 = vpop.f32.mrf.mxu0
    %v774 = vadd.f32 0.0, %v773
    %v775 = vpop.f32.mrf.mxu0
    %776 = vmatprep.mubr.bf16.mxu0 0
    %777 = vmatmul.mubr.bf16.gmra.mxu0 %v415
    %v778 = vpop.f32.mrf.mxu0
    %v779 = vadd.f32 0.0, %v778
    %v780 = vpop.f32.mrf.mxu0
    %v781 = vpop.f32.mrf.mxu0
    %v782 = vadd.f32 0.0, %v781
    %v783 = vpop.f32.mrf.mxu0
    %784 = vdwg.mxu0
    %v785 = vadd.f32 %v112, %v531
    %v786 = vadd.f32 %v113, %v534
    %v787 = vadd.f32 %v114, %v539
    %v788 = vadd.f32 %v115, %v542
    %v789 = vadd.f32 %v116, %v547
    %v790 = vadd.f32 %v117, %v550
    %v791 = vadd.f32 %v118, %v555
    %v792 = vadd.f32 %v119, %v558
    %v793 = vadd.f32 %v120, %v563
    %v794 = vadd.f32 %v121, %v566
    %v795 = vadd.f32 %v122, %v571
    %v796 = vadd.f32 %v123, %v574
    %v797 = vadd.f32 %v124, %v579
    %v798 = vadd.f32 %v125, %v582
    %v799 = vadd.f32 %v126, %v587
    %v800 = vadd.f32 %v127, %v590
    %v801 = vadd.f32 %v128, %v595
    %v802 = vadd.f32 %v129, %v598
    %v803 = vadd.f32 %v130, %v603
    %v804 = vadd.f32 %v131, %v606
    %v805 = vadd.f32 %v132, %v611
    %v806 = vadd.f32 %v133, %v614
    %v807 = vadd.f32 %v134, %v619
    %v808 = vadd.f32 %v135, %v622
    %v809 = vadd.f32 %v136, %v627
    %v810 = vadd.f32 %v137, %v630
    %v811 = vadd.f32 %v138, %v635
    %v812 = vadd.f32 %v139, %v638
    %v813 = vadd.f32 %v140, %v643
    %v814 = vadd.f32 %v141, %v646
    %v815 = vadd.f32 %v142, %v651
    %v816 = vadd.f32 %v143, %v654
    %v817 = vadd.f32 %v144, %v659
    %v818 = vadd.f32 %v145, %v662
    %v819 = vadd.f32 %v146, %v667
    %v820 = vadd.f32 %v147, %v670
    %v821 = vadd.f32 %v148, %v675
    %v822 = vadd.f32 %v149, %v678
    %v823 = vadd.f32 %v150, %v683
    %v824 = vadd.f32 %v151, %v686
    %v825 = vadd.f32 %v152, %v691
    %v826 = vadd.f32 %v153, %v694
    %v827 = vadd.f32 %v154, %v699
    %v828 = vadd.f32 %v155, %v702
    %v829 = vadd.f32 %v156, %v707
    %v830 = vadd.f32 %v157, %v710
    %v831 = vadd.f32 %v158, %v715
    %v832 = vadd.f32 %v159, %v718
    %v833 = vadd.f32 %v160, %v723
    %v834 = vadd.f32 %v161, %v726
    %v835 = vadd.f32 %v162, %v731
    %v836 = vadd.f32 %v163, %v734
    %v837 = vadd.f32 %v164, %v739
    %v838 = vadd.f32 %v165, %v742
    %v839 = vadd.f32 %v166, %v747
    %v840 = vadd.f32 %v167, %v750
    %v841 = vadd.f32 %v168, %v755
    %v842 = vadd.f32 %v169, %v758
    %v843 = vadd.f32 %v170, %v763
    %v844 = vadd.f32 %v171, %v766
    %v845 = vadd.f32 %v172, %v771
    %v846 = vadd.f32 %v173, %v774
    %v847 = vadd.f32 %v174, %v779
    %v848 = vadd.f32 %v175, %v782
    %849 = vst [vmem:[#allocation2] sm:$0xff] %v785
    %850 = vst [vmem:[#allocation2 + $0x8] sm:$0xff] %v786
    %851 = vst [vmem:[#allocation2 + $0x10] sm:$0xff] %v787
    %852 = vst [vmem:[#allocation2 + $0x18] sm:$0xff] %v788
    %853 = vst [vmem:[#allocation2 + $0x20] sm:$0xff] %v789
    %854 = vst [vmem:[#allocation2 + $0x28] sm:$0xff] %v790
    %855 = vst [vmem:[#allocation2 + $0x30] sm:$0xff] %v791
    %856 = vst [vmem:[#allocation2 + $0x38] sm:$0xff] %v792
    %857 = vst [vmem:[#allocation2 + $0x40] sm:$0xff] %v793
    %858 = vst [vmem:[#allocation2 + $0x48] sm:$0xff] %v794
    %859 = vst [vmem:[#allocation2 + $0x50] sm:$0xff] %v795
    %860 = vst [vmem:[#allocation2 + $0x58] sm:$0xff] %v796
    %861 = vst [vmem:[#allocation2 + $0x60] sm:$0xff] %v797
    %862 = vst [vmem:[#allocation2 + $0x68] sm:$0xff] %v798
    %863 = vst [vmem:[#allocation2 + $0x70] sm:$0xff] %v799
    %864 = vst [vmem:[#allocation2 + $0x78] sm:$0xff] %v800
    %865 = vst [vmem:[#allocation2 + $0x80] sm:$0xff] %v801
    %866 = vst [vmem:[#allocation2 + $0x88] sm:$0xff] %v802
    %867 = vst [vmem:[#allocation2 + $0x90] sm:$0xff] %v803
    %868 = vst [vmem:[#allocation2 + $0x98] sm:$0xff] %v804
    %869 = vst [vmem:[#allocation2 + $0xa0] sm:$0xff] %v805
    %870 = vst [vmem:[#allocation2 + $0xa8] sm:$0xff] %v806
    %871 = vst [vmem:[#allocation2 + $0xb0] sm:$0xff] %v807
    %872 = vst [vmem:[#allocation2 + $0xb8] sm:$0xff] %v808
    %873 = vst [vmem:[#allocation2 + $0xc0] sm:$0xff] %v809
    %874 = vst [vmem:[#allocation2 + $0xc8] sm:$0xff] %v810
    %875 = vst [vmem:[#allocation2 + $0xd0] sm:$0xff] %v811
    %876 = vst [vmem:[#allocation2 + $0xd8] sm:$0xff] %v812
    %877 = vst [vmem:[#allocation2 + $0xe0] sm:$0xff] %v813
    %878 = vst [vmem:[#allocation2 + $0xe8] sm:$0xff] %v814
    %879 = vst [vmem:[#allocation2 + $0xf0] sm:$0xff] %v815
    %880 = vst [vmem:[#allocation2 + $0xf8] sm:$0xff] %v816
    %881 = vst [vmem:[#allocation2 + $0x100] sm:$0xff] %v817
    %882 = vst [vmem:[#allocation2 + $0x108] sm:$0xff] %v818
    %883 = vst [vmem:[#allocation2 + $0x110] sm:$0xff] %v819
    %884 = vst [vmem:[#allocation2 + $0x118] sm:$0xff] %v820
    %885 = vst [vmem:[#allocation2 + $0x120] sm:$0xff] %v821
    %886 = vst [vmem:[#allocation2 + $0x128] sm:$0xff] %v822
    %887 = vst [vmem:[#allocation2 + $0x130] sm:$0xff] %v823
    %888 = vst [vmem:[#allocation2 + $0x138] sm:$0xff] %v824
    %889 = vst [vmem:[#allocation2 + $0x140] sm:$0xff] %v825
    %890 = vst [vmem:[#allocation2 + $0x148] sm:$0xff] %v826
    %891 = vst [vmem:[#allocation2 + $0x150] sm:$0xff] %v827
    %892 = vst [vmem:[#allocation2 + $0x158] sm:$0xff] %v828
    %893 = vst [vmem:[#allocation2 + $0x160] sm:$0xff] %v829
    %894 = vst [vmem:[#allocation2 + $0x168] sm:$0xff] %v830
    %895 = vst [vmem:[#allocation2 + $0x170] sm:$0xff] %v831
    %896 = vst [vmem:[#allocation2 + $0x178] sm:$0xff] %v832
    %897 = vst [vmem:[#allocation2 + $0x180] sm:$0xff] %v833
    %898 = vst [vmem:[#allocation2 + $0x188] sm:$0xff] %v834
    %899 = vst [vmem:[#allocation2 + $0x190] sm:$0xff] %v835
    %900 = vst [vmem:[#allocation2 + $0x198] sm:$0xff] %v836
    %901 = vst [vmem:[#allocation2 + $0x1a0] sm:$0xff] %v837
    %902 = vst [vmem:[#allocation2 + $0x1a8] sm:$0xff] %v838
    %903 = vst [vmem:[#allocation2 + $0x1b0] sm:$0xff] %v839
    %904 = vst [vmem:[#allocation2 + $0x1b8] sm:$0xff] %v840
    %905 = vst [vmem:[#allocation2 + $0x1c0] sm:$0xff] %v841
    %906 = vst [vmem:[#allocation2 + $0x1c8] sm:$0xff] %v842
    %907 = vst [vmem:[#allocation2 + $0x1d0] sm:$0xff] %v843
    %908 = vst [vmem:[#allocation2 + $0x1d8] sm:$0xff] %v844
    %909 = vst [vmem:[#allocation2 + $0x1e0] sm:$0xff] %v845
    %910 = vst [vmem:[#allocation2 + $0x1e8] sm:$0xff] %v846
    %911 = vst [vmem:[#allocation2 + $0x1f0] sm:$0xff] %v847
    %912 = vst [vmem:[#allocation2 + $0x1f8] sm:$0xff] %v848
    // Predicated region
    $region26: #{tpu_custom_call.1} parent=1 // pred_check
      %p913 = pneg %p44
    $region27: #{tpu_custom_call.1} parent=1 // pred_check_branch
      %915 = sbr.rel (%p913) target = $region29
    $region28: #{tpu_custom_call.1} parent=1 // pred_region
      %v916 = vld [vmem:[#allocation2] sm:$0xff]
      %v917 = vld [vmem:[#allocation2 + $0x8] sm:$0xff]
      %v918 = vld [vmem:[#allocation2 + $0x10] sm:$0xff]
      %v919 = vld [vmem:[#allocation2 + $0x18] sm:$0xff]
      %v920 = vld [vmem:[#allocation2 + $0x20] sm:$0xff]
      %v921 = vld [vmem:[#allocation2 + $0x28] sm:$0xff]
      %v922 = vld [vmem:[#allocation2 + $0x30] sm:$0xff]
      %v923 = vld [vmem:[#allocation2 + $0x38] sm:$0xff]
      %v924 = vld [vmem:[#allocation2 + $0x40] sm:$0xff]
      %v925 = vld [vmem:[#allocation2 + $0x48] sm:$0xff]
      %v926 = vld [vmem:[#allocation2 + $0x50] sm:$0xff]
      %v927 = vld [vmem:[#allocation2 + $0x58] sm:$0xff]
      %v928 = vld [vmem:[#allocation2 + $0x60] sm:$0xff]
      %v929 = vld [vmem:[#allocation2 + $0x68] sm:$0xff]
      %v930 = vld [vmem:[#allocation2 + $0x70] sm:$0xff]
      %v931 = vld [vmem:[#allocation2 + $0x78] sm:$0xff]
      %v932 = vld [vmem:[#allocation2 + $0x80] sm:$0xff]
      %v933 = vld [vmem:[#allocation2 + $0x88] sm:$0xff]
      %v934 = vld [vmem:[#allocation2 + $0x90] sm:$0xff]
      %v935 = vld [vmem:[#allocation2 + $0x98] sm:$0xff]
      %v936 = vld [vmem:[#allocation2 + $0xa0] sm:$0xff]
      %v937 = vld [vmem:[#allocation2 + $0xa8] sm:$0xff]
      %v938 = vld [vmem:[#allocation2 + $0xb0] sm:$0xff]
      %v939 = vld [vmem:[#allocation2 + $0xb8] sm:$0xff]
      %v940 = vld [vmem:[#allocation2 + $0xc0] sm:$0xff]
      %v941 = vld [vmem:[#allocation2 + $0xc8] sm:$0xff]
      %v942 = vld [vmem:[#allocation2 + $0xd0] sm:$0xff]
      %v943 = vld [vmem:[#allocation2 + $0xd8] sm:$0xff]
      %v944 = vld [vmem:[#allocation2 + $0xe0] sm:$0xff]
      %v945 = vld [vmem:[#allocation2 + $0xe8] sm:$0xff]
      %v946 = vld [vmem:[#allocation2 + $0xf0] sm:$0xff]
      %v947 = vld [vmem:[#allocation2 + $0xf8] sm:$0xff]
      %v948 = vld [vmem:[#allocation2 + $0x100] sm:$0xff]
      %v949 = vld [vmem:[#allocation2 + $0x108] sm:$0xff]
      %v950 = vld [vmem:[#allocation2 + $0x110] sm:$0xff]
      %v951 = vld [vmem:[#allocation2 + $0x118] sm:$0xff]
      %v952 = vld [vmem:[#allocation2 + $0x120] sm:$0xff]
      %v953 = vld [vmem:[#allocation2 + $0x128] sm:$0xff]
      %v954 = vld [vmem:[#allocation2 + $0x130] sm:$0xff]
      %v955 = vld [vmem:[#allocation2 + $0x138] sm:$0xff]
      %v956 = vld [vmem:[#allocation2 + $0x140] sm:$0xff]
      %v957 = vld [vmem:[#allocation2 + $0x148] sm:$0xff]
      %v958 = vld [vmem:[#allocation2 + $0x150] sm:$0xff]
      %v959 = vld [vmem:[#allocation2 + $0x158] sm:$0xff]
      %v960 = vld [vmem:[#allocation2 + $0x160] sm:$0xff]
      %v961 = vld [vmem:[#allocation2 + $0x168] sm:$0xff]
      %v962 = vld [vmem:[#allocation2 + $0x170] sm:$0xff]
      %v963 = vld [vmem:[#allocation2 + $0x178] sm:$0xff]
      %v964 = vld [vmem:[#allocation2 + $0x180] sm:$0xff]
      %v965 = vld [vmem:[#allocation2 + $0x188] sm:$0xff]
      %v966 = vld [vmem:[#allocation2 + $0x190] sm:$0xff]
      %v967 = vld [vmem:[#allocation2 + $0x198] sm:$0xff]
      %v968 = vld [vmem:[#allocation2 + $0x1a0] sm:$0xff]
      %v969 = vld [vmem:[#allocation2 + $0x1a8] sm:$0xff]
      %v970 = vld [vmem:[#allocation2 + $0x1b0] sm:$0xff]
      %v971 = vld [vmem:[#allocation2 + $0x1b8] sm:$0xff]
      %v972 = vld [vmem:[#allocation2 + $0x1c0] sm:$0xff]
      %v973 = vld [vmem:[#allocation2 + $0x1c8] sm:$0xff]
      %v974 = vld [vmem:[#allocation2 + $0x1d0] sm:$0xff]
      %v975 = vld [vmem:[#allocation2 + $0x1d8] sm:$0xff]
      %v976 = vld [vmem:[#allocation2 + $0x1e0] sm:$0xff]
      %v977 = vld [vmem:[#allocation2 + $0x1e8] sm:$0xff]
      %v978 = vld [vmem:[#allocation2 + $0x1f0] sm:$0xff]
      %v979 = vld [vmem:[#allocation2 + $0x1f8] sm:$0xff]
      %v980 = vld [vmem:[%s2] sm:$0x1]
      %v982 = vlaneseq
      %v983 = vshrl.u32 %v982, 7
      %v984 = vsub.s32 0, %v983
      %v985 = vrot.slane %v980, %v984
      %v987 = vadd.f32 %v916, %v985
      %v988 = vadd.f32 %v917, %v985
      %v989 = vadd.f32 %v918, %v985
      %v990 = vadd.f32 %v919, %v985
      %v991 = vadd.f32 %v920, %v985
      %v992 = vadd.f32 %v921, %v985
      %v993 = vadd.f32 %v922, %v985
      %v994 = vadd.f32 %v923, %v985
      %v995 = vadd.f32 %v924, %v985
      %v996 = vadd.f32 %v925, %v985
      %v997 = vadd.f32 %v926, %v985
      %v998 = vadd.f32 %v927, %v985
      %v999 = vadd.f32 %v928, %v985
      %v1000 = vadd.f32 %v929, %v985
      %v1001 = vadd.f32 %v930, %v985
      %v1002 = vadd.f32 %v931, %v985
      %v1003 = vadd.f32 %v932, %v985
      %v1004 = vadd.f32 %v933, %v985
      %v1005 = vadd.f32 %v934, %v985
      %v1006 = vadd.f32 %v935, %v985
      %v1007 = vadd.f32 %v936, %v985
      %v1008 = vadd.f32 %v937, %v985
      %v1009 = vadd.f32 %v938, %v985
      %v1010 = vadd.f32 %v939, %v985
      %v1011 = vadd.f32 %v940, %v985
      %v1012 = vadd.f32 %v941, %v985
      %v1013 = vadd.f32 %v942, %v985
      %v1014 = vadd.f32 %v943, %v985
      %v1015 = vadd.f32 %v944, %v985
      %v1016 = vadd.f32 %v945, %v985
      %v1017 = vadd.f32 %v946, %v985
      %v1018 = vadd.f32 %v947, %v985
      %v1019 = vadd.f32 %v948, %v985
      %v1020 = vadd.f32 %v949, %v985
      %v1021 = vadd.f32 %v950, %v985
      %v1022 = vadd.f32 %v951, %v985
      %v1023 = vadd.f32 %v952, %v985
      %v1024 = vadd.f32 %v953, %v985
      %v1025 = vadd.f32 %v954, %v985
      %v1026 = vadd.f32 %v955, %v985
      %v1027 = vadd.f32 %v956, %v985
      %v1028 = vadd.f32 %v957, %v985
      %v1029 = vadd.f32 %v958, %v985
      %v1030 = vadd.f32 %v959, %v985
      %v1031 = vadd.f32 %v960, %v985
      %v1032 = vadd.f32 %v961, %v985
      %v1033 = vadd.f32 %v962, %v985
      %v1034 = vadd.f32 %v963, %v985
      %v1035 = vadd.f32 %v964, %v985
      %v1036 = vadd.f32 %v965, %v985
      %v1037 = vadd.f32 %v966, %v985
      %v1038 = vadd.f32 %v967, %v985
      %v1039 = vadd.f32 %v968, %v985
      %v1040 = vadd.f32 %v969, %v985
      %v1041 = vadd.f32 %v970, %v985
      %v1042 = vadd.f32 %v971, %v985
      %v1043 = vadd.f32 %v972, %v985
      %v1044 = vadd.f32 %v973, %v985
      %v1045 = vadd.f32 %v974, %v985
      %v1046 = vadd.f32 %v975, %v985
      %v1047 = vadd.f32 %v976, %v985
      %v1048 = vadd.f32 %v977, %v985
      %v1049 = vadd.f32 %v978, %v985
      %v1050 = vadd.f32 %v979, %v985
      %vm1051 = vcmp.gt.f32.partialorder %v987, 0.0
      %vm1052 = vcmp.gt.f32.partialorder %v988, 0.0
      %vm1053 = vcmp.gt.f32.partialorder %v989, 0.0
      %vm1054 = vcmp.gt.f32.partialorder %v990, 0.0
      %vm1055 = vcmp.gt.f32.partialorder %v991, 0.0
      %vm1056 = vcmp.gt.f32.partialorder %v992, 0.0
      %vm1057 = vcmp.gt.f32.partialorder %v993, 0.0
      %vm1058 = vcmp.gt.f32.partialorder %v994, 0.0
      %vm1059 = vcmp.gt.f32.partialorder %v995, 0.0
      %vm1060 = vcmp.gt.f32.partialorder %v996, 0.0
      %vm1061 = vcmp.gt.f32.partialorder %v997, 0.0
      %vm1062 = vcmp.gt.f32.partialorder %v998, 0.0
      %vm1063 = vcmp.gt.f32.partialorder %v999, 0.0
      %vm1064 = vcmp.gt.f32.partialorder %v1000, 0.0
      %vm1065 = vcmp.gt.f32.partialorder %v1001, 0.0
      %vm1066 = vcmp.gt.f32.partialorder %v1002, 0.0
      %vm1067 = vcmp.gt.f32.partialorder %v1003, 0.0
      %vm1068 = vcmp.gt.f32.partialorder %v1004, 0.0
      %vm1069 = vcmp.gt.f32.partialorder %v1005, 0.0
      %vm1070 = vcmp.gt.f32.partialorder %v1006, 0.0
      %vm1071 = vcmp.gt.f32.partialorder %v1007, 0.0
      %vm1072 = vcmp.gt.f32.partialorder %v1008, 0.0
      %vm1073 = vcmp.gt.f32.partialorder %v1009, 0.0
      %vm1074 = vcmp.gt.f32.partialorder %v1010, 0.0
      %vm1075 = vcmp.gt.f32.partialorder %v1011, 0.0
      %vm1076 = vcmp.gt.f32.partialorder %v1012, 0.0
      %vm1077 = vcmp.gt.f32.partialorder %v1013, 0.0
      %vm1078 = vcmp.gt.f32.partialorder %v1014, 0.0
      %vm1079 = vcmp.gt.f32.partialorder %v1015, 0.0
      %vm1080 = vcmp.gt.f32.partialorder %v1016, 0.0
      %vm1081 = vcmp.gt.f32.partialorder %v1017, 0.0
      %vm1082 = vcmp.gt.f32.partialorder %v1018, 0.0
      %vm1083 = vcmp.gt.f32.partialorder %v1019, 0.0
      %vm1084 = vcmp.gt.f32.partialorder %v1020, 0.0
      %vm1085 = vcmp.gt.f32.partialorder %v1021, 0.0
      %vm1086 = vcmp.gt.f32.partialorder %v1022, 0.0
      %vm1087 = vcmp.gt.f32.partialorder %v1023, 0.0
      %vm1088 = vcmp.gt.f32.partialorder %v1024, 0.0
      %vm1089 = vcmp.gt.f32.partialorder %v1025, 0.0
      %vm1090 = vcmp.gt.f32.partialorder %v1026, 0.0
      %vm1091 = vcmp.gt.f32.partialorder %v1027, 0.0
      %vm1092 = vcmp.gt.f32.partialorder %v1028, 0.0
      %vm1093 = vcmp.gt.f32.partialorder %v1029, 0.0
      %vm1094 = vcmp.gt.f32.partialorder %v1030, 0.0
      %vm1095 = vcmp.gt.f32.partialorder %v1031, 0.0
      %vm1096 = vcmp.gt.f32.partialorder %v1032, 0.0
      %vm1097 = vcmp.gt.f32.partialorder %v1033, 0.0
      %vm1098 = vcmp.gt.f32.partialorder %v1034, 0.0
      %vm1099 = vcmp.gt.f32.partialorder %v1035, 0.0
      %vm1100 = vcmp.gt.f32.partialorder %v1036, 0.0
      %vm1101 = vcmp.gt.f32.partialorder %v1037, 0.0
      %vm1102 = vcmp.gt.f32.partialorder %v1038, 0.0
      %vm1103 = vcmp.gt.f32.partialorder %v1039, 0.0
      %vm1104 = vcmp.gt.f32.partialorder %v1040, 0.0
      %vm1105 = vcmp.gt.f32.partialorder %v1041, 0.0
      %vm1106 = vcmp.gt.f32.partialorder %v1042, 0.0
      %vm1107 = vcmp.gt.f32.partialorder %v1043, 0.0
      %vm1108 = vcmp.gt.f32.partialorder %v1044, 0.0
      %vm1109 = vcmp.gt.f32.partialorder %v1045, 0.0
      %vm1110 = vcmp.gt.f32.partialorder %v1046, 0.0
      %vm1111 = vcmp.gt.f32.partialorder %v1047, 0.0
      %vm1112 = vcmp.gt.f32.partialorder %v1048, 0.0
      %vm1113 = vcmp.gt.f32.partialorder %v1049, 0.0
      %vm1114 = vcmp.gt.f32.partialorder %v1050, 0.0
      %v1115 = vmul.f32 %v987, 0.1
      %v1116 = vmul.f32 %v988, 0.1
      %v1117 = vmul.f32 %v989, 0.1
      %v1118 = vmul.f32 %v990, 0.1
      %v1119 = vmul.f32 %v991, 0.1
      %v1120 = vmul.f32 %v992, 0.1
      %v1121 = vmul.f32 %v993, 0.1
      %v1122 = vmul.f32 %v994, 0.1
      %v1123 = vmul.f32 %v995, 0.1
      %v1124 = vmul.f32 %v996, 0.1
      %v1125 = vmul.f32 %v997, 0.1
      %v1126 = vmul.f32 %v998, 0.1
      %v1127 = vmul.f32 %v999, 0.1
      %v1128 = vmul.f32 %v1000, 0.1
      %v1129 = vmul.f32 %v1001, 0.1
      %v1130 = vmul.f32 %v1002, 0.1
      %v1131 = vmul.f32 %v1003, 0.1
      %v1132 = vmul.f32 %v1004, 0.1
      %v1133 = vmul.f32 %v1005, 0.1
      %v1134 = vmul.f32 %v1006, 0.1
      %v1135 = vmul.f32 %v1007, 0.1
      %v1136 = vmul.f32 %v1008, 0.1
      %v1137 = vmul.f32 %v1009, 0.1
      %v1138 = vmul.f32 %v1010, 0.1
      %v1139 = vmul.f32 %v1011, 0.1
      %v1140 = vmul.f32 %v1012, 0.1
      %v1141 = vmul.f32 %v1013, 0.1
      %v1142 = vmul.f32 %v1014, 0.1
      %v1143 = vmul.f32 %v1015, 0.1
      %v1144 = vmul.f32 %v1016, 0.1
      %v1145 = vmul.f32 %v1017, 0.1
      %v1146 = vmul.f32 %v1018, 0.1
      %v1147 = vmul.f32 %v1019, 0.1
      %v1148 = vmul.f32 %v1020, 0.1
      %v1149 = vmul.f32 %v1021, 0.1
      %v1150 = vmul.f32 %v1022, 0.1
      %v1151 = vmul.f32 %v1023, 0.1
      %v1152 = vmul.f32 %v1024, 0.1
      %v1153 = vmul.f32 %v1025, 0.1
      %v1154 = vmul.f32 %v1026, 0.1
      %v1155 = vmul.f32 %v1027, 0.1
      %v1156 = vmul.f32 %v1028, 0.1
      %v1157 = vmul.f32 %v1029, 0.1
      %v1158 = vmul.f32 %v1030, 0.1
      %v1159 = vmul.f32 %v1031, 0.1
      %v1160 = vmul.f32 %v1032, 0.1
      %v1161 = vmul.f32 %v1033, 0.1
      %v1162 = vmul.f32 %v1034, 0.1
      %v1163 = vmul.f32 %v1035, 0.1
      %v1164 = vmul.f32 %v1036, 0.1
      %v1165 = vmul.f32 %v1037, 0.1
      %v1166 = vmul.f32 %v1038, 0.1
      %v1167 = vmul.f32 %v1039, 0.1
      %v1168 = vmul.f32 %v1040, 0.1
      %v1169 = vmul.f32 %v1041, 0.1
      %v1170 = vmul.f32 %v1042, 0.1
      %v1171 = vmul.f32 %v1043, 0.1
      %v1172 = vmul.f32 %v1044, 0.1
      %v1173 = vmul.f32 %v1045, 0.1
      %v1174 = vmul.f32 %v1046, 0.1
      %v1175 = vmul.f32 %v1047, 0.1
      %v1176 = vmul.f32 %v1048, 0.1
      %v1177 = vmul.f32 %v1049, 0.1
      %v1178 = vmul.f32 %v1050, 0.1
      %v1179 = vsel %vm1051, %v987, %v1115
      %v1180 = vsel %vm1052, %v988, %v1116
      %v1181 = vsel %vm1053, %v989, %v1117
      %v1182 = vsel %vm1054, %v990, %v1118
      %v1183 = vsel %vm1055, %v991, %v1119
      %v1184 = vsel %vm1056, %v992, %v1120
      %v1185 = vsel %vm1057, %v993, %v1121
      %v1186 = vsel %vm1058, %v994, %v1122
      %v1187 = vsel %vm1059, %v995, %v1123
      %v1188 = vsel %vm1060, %v996, %v1124
      %v1189 = vsel %vm1061, %v997, %v1125
      %v1190 = vsel %vm1062, %v998, %v1126
      %v1191 = vsel %vm1063, %v999, %v1127
      %v1192 = vsel %vm1064, %v1000, %v1128
      %v1193 = vsel %vm1065, %v1001, %v1129
      %v1194 = vsel %vm1066, %v1002, %v1130
      %v1195 = vsel %vm1067, %v1003, %v1131
      %v1196 = vsel %vm1068, %v1004, %v1132
      %v1197 = vsel %vm1069, %v1005, %v1133
      %v1198 = vsel %vm1070, %v1006, %v1134
      %v1199 = vsel %vm1071, %v1007, %v1135
      %v1200 = vsel %vm1072, %v1008, %v1136
      %v1201 = vsel %vm1073, %v1009, %v1137
      %v1202 = vsel %vm1074, %v1010, %v1138
      %v1203 = vsel %vm1075, %v1011, %v1139
      %v1204 = vsel %vm1076, %v1012, %v1140
      %v1205 = vsel %vm1077, %v1013, %v1141
      %v1206 = vsel %vm1078, %v1014, %v1142
      %v1207 = vsel %vm1079, %v1015, %v1143
      %v1208 = vsel %vm1080, %v1016, %v1144
      %v1209 = vsel %vm1081, %v1017, %v1145
      %v1210 = vsel %vm1082, %v1018, %v1146
      %v1211 = vsel %vm1083, %v1019, %v1147
      %v1212 = vsel %vm1084, %v1020, %v1148
      %v1213 = vsel %vm1085, %v1021, %v1149
      %v1214 = vsel %vm1086, %v1022, %v1150
      %v1215 = vsel %vm1087, %v1023, %v1151
      %v1216 = vsel %vm1088, %v1024, %v1152
      %v1217 = vsel %vm1089, %v1025, %v1153
      %v1218 = vsel %vm1090, %v1026, %v1154
      %v1219 = vsel %vm1091, %v1027, %v1155
      %v1220 = vsel %vm1092, %v1028, %v1156
      %v1221 = vsel %vm1093, %v1029, %v1157
      %v1222 = vsel %vm1094, %v1030, %v1158
      %v1223 = vsel %vm1095, %v1031, %v1159
      %v1224 = vsel %vm1096, %v1032, %v1160
      %v1225 = vsel %vm1097, %v1033, %v1161
      %v1226 = vsel %vm1098, %v1034, %v1162
      %v1227 = vsel %vm1099, %v1035, %v1163
      %v1228 = vsel %vm1100, %v1036, %v1164
      %v1229 = vsel %vm1101, %v1037, %v1165
      %v1230 = vsel %vm1102, %v1038, %v1166
      %v1231 = vsel %vm1103, %v1039, %v1167
      %v1232 = vsel %vm1104, %v1040, %v1168
      %v1233 = vsel %vm1105, %v1041, %v1169
      %v1234 = vsel %vm1106, %v1042, %v1170
      %v1235 = vsel %vm1107, %v1043, %v1171
      %v1236 = vsel %vm1108, %v1044, %v1172
      %v1237 = vsel %vm1109, %v1045, %v1173
      %v1238 = vsel %vm1110, %v1046, %v1174
      %v1239 = vsel %vm1111, %v1047, %v1175
      %v1240 = vsel %vm1112, %v1048, %v1176
      %v1241 = vsel %vm1113, %v1049, %v1177
      %v1242 = vsel %vm1114, %v1050, %v1178
      %1243 = vst [vmem:[#allocation8] sm:$0xff] %v1179
      %1244 = vst [vmem:[#allocation8 + $0x8] sm:$0xff] %v1180
      %1245 = vst [vmem:[#allocation8 + $0x10] sm:$0xff] %v1181
      %1246 = vst [vmem:[#allocation8 + $0x18] sm:$0xff] %v1182
      %1247 = vst [vmem:[#allocation8 + $0x20] sm:$0xff] %v1183
      %1248 = vst [vmem:[#allocation8 + $0x28] sm:$0xff] %v1184
      %1249 = vst [vmem:[#allocation8 + $0x30] sm:$0xff] %v1185
      %1250 = vst [vmem:[#allocation8 + $0x38] sm:$0xff] %v1186
      %1251 = vst [vmem:[#allocation8 + $0x40] sm:$0xff] %v1187
      %1252 = vst [vmem:[#allocation8 + $0x48] sm:$0xff] %v1188
      %1253 = vst [vmem:[#allocation8 + $0x50] sm:$0xff] %v1189
      %1254 = vst [vmem:[#allocation8 + $0x58] sm:$0xff] %v1190
      %1255 = vst [vmem:[#allocation8 + $0x60] sm:$0xff] %v1191
      %1256 = vst [vmem:[#allocation8 + $0x68] sm:$0xff] %v1192
      %1257 = vst [vmem:[#allocation8 + $0x70] sm:$0xff] %v1193
      %1258 = vst [vmem:[#allocation8 + $0x78] sm:$0xff] %v1194
      %1259 = vst [vmem:[#allocation8 + $0x80] sm:$0xff] %v1195
      %1260 = vst [vmem:[#allocation8 + $0x88] sm:$0xff] %v1196
      %1261 = vst [vmem:[#allocation8 + $0x90] sm:$0xff] %v1197
      %1262 = vst [vmem:[#allocation8 + $0x98] sm:$0xff] %v1198
      %1263 = vst [vmem:[#allocation8 + $0xa0] sm:$0xff] %v1199
      %1264 = vst [vmem:[#allocation8 + $0xa8] sm:$0xff] %v1200
      %1265 = vst [vmem:[#allocation8 + $0xb0] sm:$0xff] %v1201
      %1266 = vst [vmem:[#allocation8 + $0xb8] sm:$0xff] %v1202
      %1267 = vst [vmem:[#allocation8 + $0xc0] sm:$0xff] %v1203
      %1268 = vst [vmem:[#allocation8 + $0xc8] sm:$0xff] %v1204
      %1269 = vst [vmem:[#allocation8 + $0xd0] sm:$0xff] %v1205
      %1270 = vst [vmem:[#allocation8 + $0xd8] sm:$0xff] %v1206
      %1271 = vst [vmem:[#allocation8 + $0xe0] sm:$0xff] %v1207
      %1272 = vst [vmem:[#allocation8 + $0xe8] sm:$0xff] %v1208
      %1273 = vst [vmem:[#allocation8 + $0xf0] sm:$0xff] %v1209
      %1274 = vst [vmem:[#allocation8 + $0xf8] sm:$0xff] %v1210
      %1275 = vst [vmem:[#allocation8 + $0x100] sm:$0xff] %v1211
      %1276 = vst [vmem:[#allocation8 + $0x108] sm:$0xff] %v1212
      %1277 = vst [vmem:[#allocation8 + $0x110] sm:$0xff] %v1213
      %1278 = vst [vmem:[#allocation8 + $0x118] sm:$0xff] %v1214
      %1279 = vst [vmem:[#allocation8 + $0x120] sm:$0xff] %v1215
      %1280 = vst [vmem:[#allocation8 + $0x128] sm:$0xff] %v1216
      %1281 = vst [vmem:[#allocation8 + $0x130] sm:$0xff] %v1217
      %1282 = vst [vmem:[#allocation8 + $0x138] sm:$0xff] %v1218
      %1283 = vst [vmem:[#allocation8 + $0x140] sm:$0xff] %v1219
      %1284 = vst [vmem:[#allocation8 + $0x148] sm:$0xff] %v1220
      %1285 = vst [vmem:[#allocation8 + $0x150] sm:$0xff] %v1221
      %1286 = vst [vmem:[#allocation8 + $0x158] sm:$0xff] %v1222
      %1287 = vst [vmem:[#allocation8 + $0x160] sm:$0xff] %v1223
      %1288 = vst [vmem:[#allocation8 + $0x168] sm:$0xff] %v1224
      %1289 = vst [vmem:[#allocation8 + $0x170] sm:$0xff] %v1225
      %1290 = vst [vmem:[#allocation8 + $0x178] sm:$0xff] %v1226
      %1291 = vst [vmem:[#allocation8 + $0x180] sm:$0xff] %v1227
      %1292 = vst [vmem:[#allocation8 + $0x188] sm:$0xff] %v1228
      %1293 = vst [vmem:[#allocation8 + $0x190] sm:$0xff] %v1229
      %1294 = vst [vmem:[#allocation8 + $0x198] sm:$0xff] %v1230
      %1295 = vst [vmem:[#allocation8 + $0x1a0] sm:$0xff] %v1231
      %1296 = vst [vmem:[#allocation8 + $0x1a8] sm:$0xff] %v1232
      %1297 = vst [vmem:[#allocation8 + $0x1b0] sm:$0xff] %v1233
      %1298 = vst [vmem:[#allocation8 + $0x1b8] sm:$0xff] %v1234
      %1299 = vst [vmem:[#allocation8 + $0x1c0] sm:$0xff] %v1235
      %1300 = vst [vmem:[#allocation8 + $0x1c8] sm:$0xff] %v1236
      %1301 = vst [vmem:[#allocation8 + $0x1d0] sm:$0xff] %v1237
      %1302 = vst [vmem:[#allocation8 + $0x1d8] sm:$0xff] %v1238
      %1303 = vst [vmem:[#allocation8 + $0x1e0] sm:$0xff] %v1239
      %1304 = vst [vmem:[#allocation8 + $0x1e8] sm:$0xff] %v1240
      %1305 = vst [vmem:[#allocation8 + $0x1f0] sm:$0xff] %v1241
      %1306 = vst [vmem:[#allocation8 + $0x1f8] sm:$0xff] %v1242
    $region29: #{tpu_custom_call.1} parent=1 // pred_fallthru
      _
    // Predicated region
    $region30: #{tpu_custom_call.1} parent=1 // pred_check
      _
    $region31: #{tpu_custom_call.1} parent=1 // pred_check_branch
      %1308 = sbr.rel (0) target = $region33
    $region32: #{tpu_custom_call.1} parent=1 // pred_region
      %s1310 = ssub.s32 8192, 8192
      %1311 = vsyncadd [#allocation5], %s1310
      %s1312 = sshll.u32 [#allocation8], 4
      %s1313 = int_to_ptr.vmem [resolvable:$true] %s1312
      %1318 = dma.vmem_to_hbm [thread:$0]  %s1313, 8192, %s3, [#allocation5], 128, 128, 8
    $region33: #{tpu_custom_call.1} parent=1 // pred_fallthru
      _
    // Predicated region
    $region34: #{tpu_custom_call.1} parent=1 // pred_check
      _
    $region35: #{tpu_custom_call.1} parent=1 // pred_check_branch
      %1320 = sbr.rel (0) target = $region37
    $region36: #{tpu_custom_call.1} parent=1 // pred_region
      %1321 = dma.done [#allocation5], 8192
    $region37: #{tpu_custom_call.1} parent=1 // pred_fallthru
      _
    %1322 = vsyncpa [#allocation4], 1
    %1323 = vsyncpa [#allocation7], 1
    %1324 = vsyncpa [#allocation5], 1

</llo_original>
